<compile_context>
chip_gen: v5e
topology: v5e:2x2
jax: 0.10.0
libtpu: 0.0.40
codegen_flags: <defaults>
</compile_context>

<pallas_src>
import functools
import math

import jax
import jax.numpy as jnp
from jax.experimental import pallas as pl
from jax.experimental.pallas import tpu as pltpu


# ----------------------------------------------------------------------------
# In-kernel math helpers (f32)
# ----------------------------------------------------------------------------
def _erf_f32(x):
    # Abramowitz & Stegun 7.1.26 rational approximation, max abs error 1.5e-7.
    # Uses only VPU arithmetic + one EUP exp -> always lowerable in Pallas TPU.
    a1 = 0.254829592
    a2 = -0.284496736
    a3 = 1.421413741
    a4 = -1.453152027
    a5 = 1.061405429
    p = 0.3275911
    ax = jnp.abs(x)
    t = 1.0 / (1.0 + p * ax)
    poly = t * (a1 + t * (a2 + t * (a3 + t * (a4 + t * a5))))
    y = 1.0 - poly * jnp.exp(-ax * ax)
    return jnp.where(x < 0.0, -y, y)


def _gelu_exact_f32(x):
    # PyTorch nn.GELU() default (approximate='none'): 0.5*x*(1+erf(x/sqrt(2)))
    inv_sqrt2 = 1.0 / math.sqrt(2.0)
    return 0.5 * x * (1.0 + _erf_f32(x * inv_sqrt2))


# ----------------------------------------------------------------------------
# Fused MLPBlock kernel:  y = (GELU(x @ W1 + b1)) @ W2 + b2
# ----------------------------------------------------------------------------
def mlp_block_kernel(x_ref, w1_ref, b1_ref, w2_ref, b2_ref, o_ref):
    x = x_ref[...].astype(jnp.float32)                       # (TM, C)
    h = jnp.dot(x, w1_ref[...], preferred_element_type=jnp.float32)
    h = h + b1_ref[...]                                      # (TM, M) + (1, M)
    h = _gelu_exact_f32(h)
    y = jnp.dot(h, w2_ref[...], preferred_element_type=jnp.float32)
    y = y + b2_ref[...]                                      # (TM, C) + (1, C)
    o_ref[...] = y.astype(o_ref.dtype)


def mlp_block(params, x, *, block_rows=64):
    """Applies MLPBlock to x of shape (..., C). Weights: w1 (C, M), w2 (M, C)."""
    *lead, C = x.shape
    M = params["w1"].shape[1]

    # Fold all leading dims into the sublane (row) axis.
    x2 = x.reshape(-1, C)
    rows = x2.shape[0]

    # Row tile: multiple of 8 sublanes; pad rows so the grid divides evenly.
    tm = min(block_rows, max(8, rows))
    tm = ((tm + 7) // 8) * 8
    rows_p = pl.cdiv(rows, tm) * tm
    if rows_p != rows:
        x2 = jnp.pad(x2, ((0, rows_p - rows), (0, 0)))
    grid = (rows_p // tm,)

    out = pl.pallas_call(
        mlp_block_kernel,
        out_shape=jax.ShapeDtypeStruct((rows_p, C), x.dtype),
        grid=grid,
        in_specs=[
            pl.BlockSpec((tm, C), lambda i: (i, 0)),    # activations: row tiles
            pl.BlockSpec((C, M), lambda i: (0, 0)),     # W1 (whole, VMEM-resident)
            pl.BlockSpec((1, M), lambda i: (0, 0)),     # b1
            pl.BlockSpec((M, C), lambda i: (0, 0)),     # W2
            pl.BlockSpec((1, C), lambda i: (0, 0)),     # b2
        ],
        out_specs=pl.BlockSpec((tm, C), lambda i: (i, 0)),
        compiler_params=pltpu.CompilerParams(
            dimension_semantics=("parallel",)),         # lets v7x split tiles
    )(x2, params["w1"], params["b1"], params["w2"], params["b2"])

    out = out[:rows]
    return out.reshape(*lead, C)


# ----------------------------------------------------------------------------
# Parameter init (deterministic, synthetic) and pure-JAX reference
# ----------------------------------------------------------------------------
def init_mlp_block(key, embedding_dim, mlp_dim, scale=0.05):
    k1, k2, k3, k4 = jax.random.split(key, 4)
    w1 = scale * jax.random.normal(k1, (embedding_dim, mlp_dim), jnp.float32)
    b1 = scale * jax.random.normal(k2, (1, mlp_dim), jnp.float32)
    w2 = scale * jax.random.normal(k3, (mlp_dim, embedding_dim), jnp.float32)
    b2 = scale * jax.random.normal(k4, (1, embedding_dim), jnp.float32)
    return dict(w1=w1, b1=b1, w2=w2, b2=b2)


def mlp_block_reference(params, x):
    h = x @ params["w1"] + params["b1"][0]
    h = jax.nn.gelu(h, approximate=False)         # exact GELU, matches nn.GELU()
    return h @ params["w2"] + params["b2"][0]


# ----------------------------------------------------------------------------
if __name__ == "__main__":
    # Small config consistent with the module (SAM-style MLPBlock):
    # embedding_dim=256 (lane-dense, multiple of 128), mlp_dim=512,
    # batch=2, 64 tokens (e.g. an 8x8 spatial grid flattened).
    EMBED_DIM = 256
    MLP_DIM = 512
    B, N = 2, 64

    root = jax.random.PRNGKey(0)
    k_params, k_x = jax.random.split(root)

    params = init_mlp_block(k_params, EMBED_DIM, MLP_DIM)
    x = jax.random.normal(k_x, (B, N, EMBED_DIM), jnp.float32)

    fwd = jax.jit(mlp_block)
    y = fwd(params, x)
    jax.block_until_ready(y)

    y_ref = mlp_block_reference(params, x)

    assert y.shape == (B, N, EMBED_DIM)
    assert bool(jnp.all(jnp.isfinite(y)))
    max_err = float(jnp.max(jnp.abs(y - y_ref)))
    assert max_err < 2e-3, f"mismatch vs reference: max_err={max_err}"
    print("KERNEL_OK")
</pallas_src>

<mosaic_0001>
module attributes {stable_mosaic.version = 11 : i64} {
  func.func @mlp_block_kernel(%arg0: i32, %arg1: memref<64x256xf32, #tpu.memory_space<vmem>>, %arg2: memref<256x512xf32, #tpu.memory_space<vmem>>, %arg3: memref<1x512xf32, #tpu.memory_space<vmem>>, %arg4: memref<512x256xf32, #tpu.memory_space<vmem>>, %arg5: memref<1x256xf32, #tpu.memory_space<vmem>>, %arg6: memref<64x256xf32, #tpu.memory_space<vmem>>) attributes {dimension_semantics = [#tpu.dimension_semantics<parallel>], iteration_bounds = array<i64: 2>, scalar_prefetch = 0 : i64, scratch_operands = 0 : i64, tpu.core_type = #tpu.core_type<tc>, window_params = [{transform_indices = @transform_0, window_bounds = array<i64: 64, 256>}, {pipeline_mode = #tpu.pipeline_mode<synchronous>, transform_indices = @transform_1, window_bounds = array<i64: 256, 512>}, {pipeline_mode = #tpu.pipeline_mode<synchronous>, transform_indices = @transform_2, window_bounds = array<i64: 1, 512>}, {pipeline_mode = #tpu.pipeline_mode<synchronous>, transform_indices = @transform_3, window_bounds = array<i64: 512, 256>}, {pipeline_mode = #tpu.pipeline_mode<synchronous>, transform_indices = @transform_4, window_bounds = array<i64: 1, 256>}, {transform_indices = @transform_5, window_bounds = array<i64: 64, 256>}]} {
    %c0 = arith.constant 0 : index
    %c0_0 = arith.constant 0 : index
    %0 = vector.load %arg1[%c0, %c0_0] : memref<64x256xf32, #tpu.memory_space<vmem>>, vector<64x256xf32>
    %c0_1 = arith.constant 0 : index
    %c0_2 = arith.constant 0 : index
    %1 = vector.load %arg2[%c0_1, %c0_2] : memref<256x512xf32, #tpu.memory_space<vmem>>, vector<256x512xf32>
    %cst = arith.constant dense<0.000000e+00> : vector<64x512xf32>
    %2 = tpu.matmul %0, %1, %cst {dimension_numbers = #tpu.dot_dimension_numbers<[1], [0], [0], [1], [0, 0, 1, 1], [], []>} : vector<64x256xf32>, vector<256x512xf32>, vector<64x512xf32> -> vector<64x512xf32>
    %c0_3 = arith.constant 0 : index
    %c0_4 = arith.constant 0 : index
    %3 = vector.load %arg3[%c0_3, %c0_4] : memref<1x512xf32, #tpu.memory_space<vmem>>, vector<1x512xf32>
    %4 = vector.broadcast %3 : vector<1x512xf32> to vector<64x512xf32>
    %5 = arith.addf %2, %4 : vector<64x512xf32>
    %cst_5 = arith.constant 5.000000e-01 : f32
    %6 = vector.broadcast %cst_5 : f32 to vector<64x512xf32>
    %7 = arith.mulf %6, %5 : vector<64x512xf32>
    %cst_6 = arith.constant 0.707106769 : f32
    %8 = vector.broadcast %cst_6 : f32 to vector<64x512xf32>
    %9 = arith.mulf %5, %8 : vector<64x512xf32>
    %10 = math.absf %9 : vector<64x512xf32>
    %cst_7 = arith.constant 0.327591091 : f32
    %11 = vector.broadcast %cst_7 : f32 to vector<64x512xf32>
    %12 = arith.mulf %11, %10 : vector<64x512xf32>
    %cst_8 = arith.constant 1.000000e+00 : f32
    %13 = vector.broadcast %cst_8 : f32 to vector<64x512xf32>
    %14 = arith.addf %13, %12 : vector<64x512xf32>
    %cst_9 = arith.constant 1.000000e+00 : f32
    %15 = vector.broadcast %cst_9 : f32 to vector<64x512xf32>
    %16 = arith.divf %15, %14 : vector<64x512xf32>
    %cst_10 = arith.constant 1.06140542 : f32
    %17 = vector.broadcast %cst_10 : f32 to vector<64x512xf32>
    %18 = arith.mulf %16, %17 : vector<64x512xf32>
    %cst_11 = arith.constant -1.45315206 : f32
    %19 = vector.broadcast %cst_11 : f32 to vector<64x512xf32>
    %20 = arith.addf %19, %18 : vector<64x512xf32>
    %21 = arith.mulf %16, %20 : vector<64x512xf32>
    %cst_12 = arith.constant 1.42141378 : f32
    %22 = vector.broadcast %cst_12 : f32 to vector<64x512xf32>
    %23 = arith.addf %22, %21 : vector<64x512xf32>
    %24 = arith.mulf %16, %23 : vector<64x512xf32>
    %cst_13 = arith.constant -0.284496725 : f32
    %25 = vector.broadcast %cst_13 : f32 to vector<64x512xf32>
    %26 = arith.addf %25, %24 : vector<64x512xf32>
    %27 = arith.mulf %16, %26 : vector<64x512xf32>
    %cst_14 = arith.constant 0.254829586 : f32
    %28 = vector.broadcast %cst_14 : f32 to vector<64x512xf32>
    %29 = arith.addf %28, %27 : vector<64x512xf32>
    %30 = arith.mulf %16, %29 : vector<64x512xf32>
    %cst_15 = arith.constant 0.000000e+00 : f32
    %31 = vector.broadcast %cst_15 : f32 to vector<64x512xf32>
    %32 = arith.subf %31, %10 : vector<64x512xf32>
    %33 = arith.mulf %32, %10 : vector<64x512xf32>
    %34 = math.exp %33 : vector<64x512xf32>
    %35 = arith.mulf %30, %34 : vector<64x512xf32>
    %cst_16 = arith.constant 1.000000e+00 : f32
    %36 = vector.broadcast %cst_16 : f32 to vector<64x512xf32>
    %37 = arith.subf %36, %35 : vector<64x512xf32>
    %cst_17 = arith.constant 0.000000e+00 : f32
    %38 = vector.broadcast %cst_17 : f32 to vector<64x512xf32>
    %39 = arith.cmpf olt, %9, %38 : vector<64x512xf32>
    %cst_18 = arith.constant 0.000000e+00 : f32
    %40 = vector.broadcast %cst_18 : f32 to vector<64x512xf32>
    %41 = arith.subf %40, %37 : vector<64x512xf32>
    %42 = arith.select %39, %41, %37 : vector<64x512xi1>, vector<64x512xf32>
    %cst_19 = arith.constant 1.000000e+00 : f32
    %43 = vector.broadcast %cst_19 : f32 to vector<64x512xf32>
    %44 = arith.addf %43, %42 : vector<64x512xf32>
    %45 = arith.mulf %7, %44 : vector<64x512xf32>
    %c0_20 = arith.constant 0 : index
    %c0_21 = arith.constant 0 : index
    %46 = vector.load %arg4[%c0_20, %c0_21] : memref<512x256xf32, #tpu.memory_space<vmem>>, vector<512x256xf32>
    %cst_22 = arith.constant dense<0.000000e+00> : vector<64x256xf32>
    %47 = tpu.matmul %45, %46, %cst_22 {dimension_numbers = #tpu.dot_dimension_numbers<[1], [0], [0], [1], [0, 0, 1, 1], [], []>} : vector<64x512xf32>, vector<512x256xf32>, vector<64x256xf32> -> vector<64x256xf32>
    %c0_23 = arith.constant 0 : index
    %c0_24 = arith.constant 0 : index
    %48 = vector.load %arg5[%c0_23, %c0_24] : memref<1x256xf32, #tpu.memory_space<vmem>>, vector<1x256xf32>
    %49 = vector.broadcast %48 : vector<1x256xf32> to vector<64x256xf32>
    %50 = arith.addf %47, %49 : vector<64x256xf32>
    %c0_25 = arith.constant 0 : index
    %c0_26 = arith.constant 0 : index
    %51 = vector.load %arg6[%c0_25, %c0_26] : memref<64x256xf32, #tpu.memory_space<vmem>>, vector<64x256xf32>
    tpu.vector_store %arg6[%c0_25, %c0_26], %50 {strides = array<i32>} : memref<64x256xf32, #tpu.memory_space<vmem>>, vector<64x256xf32>,
    return
  }
  func.func @transform_0(%arg0: i32) -> (i32, i32) {
    %c0_i32 = arith.constant 0 : i32
    %c0_i32_0 = arith.constant 0 : i32
    return %arg0, %c0_i32 : i32, i32
  }
  func.func @transform_1(%arg0: i32) -> (i32, i32) {
    %c0_i32 = arith.constant 0 : i32
    %c0_i32_0 = arith.constant 0 : i32
    %c0_i32_1 = arith.constant 0 : i32
    return %c0_i32, %c0_i32_0 : i32, i32
  }
  func.func @transform_2(%arg0: i32) -> (i32, i32) {
    %c0_i32 = arith.constant 0 : i32
    %c0_i32_0 = arith.constant 0 : i32
    %c0_i32_1 = arith.constant 0 : i32
    return %c0_i32, %c0_i32_0 : i32, i32
  }
  func.func @transform_3(%arg0: i32) -> (i32, i32) {
    %c0_i32 = arith.constant 0 : i32
    %c0_i32_0 = arith.constant 0 : i32
    %c0_i32_1 = arith.constant 0 : i32
    return %c0_i32, %c0_i32_0 : i32, i32
  }
  func.func @transform_4(%arg0: i32) -> (i32, i32) {
    %c0_i32 = arith.constant 0 : i32
    %c0_i32_0 = arith.constant 0 : i32
    %c0_i32_1 = arith.constant 0 : i32
    return %c0_i32, %c0_i32_0 : i32, i32
  }
  func.func @transform_5(%arg0: i32) -> (i32, i32) {
    %c0_i32 = arith.constant 0 : i32
    %c0_i32_0 = arith.constant 0 : i32
    return %arg0, %c0_i32 : i32, i32
  }
}

</mosaic_0001>

<llo_original>
// kernel: mlp_block.1
$region0: #{mlp_block.1}
  #allocation0 [shape = 'u32[]', space=smem, size = 0x4, offset = 0x4, fixed_abs, tag = 'smem constant byte address 0x4 - core index']
  #allocation1 [shape = 'u32[72,128]{1,0:T(1,128)}', space=vmem, size = 0x9000, scoped, tag = 'internal scratch']
  %s0 = inlined_call_operand.hbm [shape: f32[128,256], index: 0, kind: input, shape index: {}]
  %s1 = inlined_call_operand.hbm [shape: f32[256,512], index: 1, kind: input, shape index: {}]
  %s2 = inlined_call_operand.hbm [shape: f32[1,512], index: 2, kind: input, shape index: {}]
  %s3 = inlined_call_operand.hbm [shape: f32[512,256], index: 3, kind: input, shape index: {}]
  %s4 = inlined_call_operand.hbm [shape: f32[1,256], index: 4, kind: input, shape index: {}]
  %s5 = inlined_call_operand.hbm [shape: f32[128,256], index: 5, kind: output, shape index: {}]
  %s6 = sld [smem:[#allocation0]]
  $region73: #{mlp_block.1} parent=0
    _
  %s8 = ssub.s32 1, %s6
  %s9 = scalar_select 0, %s8, %s6
  $region1: #{mlp_block.1} parent=0
    #allocation2 [shape = 'u8[131072]{0}', space=vmem, size = 0x20000, scoped, tag = 'input window, operand 0']
    #allocation3 [shape = 's32[2]{0}', space=sflag, size = 0x8, scoped, tag = 'scoped memory for mlp_block.1']
    #allocation4 [shape = 's32[2]{0}', space=sflag, size = 0x8, scoped, tag = 'scoped memory for mlp_block.1']
    #allocation5 [shape = 'u8[524288]{0}', space=vmem, size = 0x80000, scoped, tag = 'input window, operand 1, single buffered']
    #allocation6 [shape = 's32[1]{0}', space=sflag, size = 0x4, scoped, tag = 'scoped memory for mlp_block.1']
    #allocation7 [shape = 'u8[2048]{0}', space=vmem, size = 0x800, scoped, tag = 'input window, operand 2, single buffered']
    #allocation8 [shape = 'u8[524288]{0}', space=vmem, size = 0x80000, scoped, tag = 'input window, operand 3, single buffered']
    #allocation9 [shape = 's32[1]{0}', space=sflag, size = 0x4, scoped, tag = 'scoped memory for mlp_block.1']
    #allocation10 [shape = 'u8[1024]{0}', space=vmem, size = 0x400, scoped, tag = 'input window, operand 4, single buffered']
    #allocation11 [shape = 'u8[131072]{0}', space=vmem, size = 0x20000, scoped, tag = 'output window, operand 0']
    %10 = vsyncpa [#allocation3], 0
    %s11 = scalar_lea.sflag [#allocation3], 1
    %12 = vsyncpa %s11, 0
    %13 = vsyncpa [#allocation6], 0
    %14 = vsyncpa [#allocation9], 0
    %15 = vsyncpa [#allocation4], 0
    %s16 = scalar_lea.sflag [#allocation4], 1
    %17 = vsyncpa %s16, 0
    loop: start=0, step=1, limit=4
    $region2: #{mlp_block.1} parent=1 // loop_pre_header
      _
    $region3: #{mlp_block.1} parent=1 // loop_header
      %s19 = sphi 0, %s23
      %p20 = scmp.ge.s32.totalorder %s19, 4
      %s29 = sphi 0, %s31
      %s32 = sphi 0, %s29
      %s33 = sphi 0, %s32
      %s49 = sphi 0, %s33
      %s53 = sphi 0, %s53
      %s55 = sphi 0, %s53
      %s56 = sphi 0, %s55
      %s70 = sphi 0, %s56
      %s74 = sphi 0, %s74
      %s76 = sphi 0, %s74
      %s77 = sphi 0, %s76
      %s91 = sphi 0, %s77
      %s95 = sphi 0, %s95
      %s97 = sphi 0, %s95
      %s98 = sphi 0, %s97
      %s112 = sphi 0, %s98
      %s116 = sphi 0, %s116
      %s118 = sphi 0, %s116
      %s119 = sphi 0, %s118
      %s133 = sphi 0, %s119
      %s139 = sphi 0, %s141
      %s142 = sphi 0, %s139
      %s143 = sphi 0, %s142
      %s159 = sphi 0, %s143
    $region4: #{mlp_block.1} parent=1 // loop_header_branch
      %22 = sbr.rel (%p20) target = $region8
    $region5: #{mlp_block.1} parent=1 // loop_body
      %s24 = ssub.s32 %s19, 1
      %s25 = ssub.s32 %s19, 2
      %s26 = sadd.s32 %s19, 1
      %s27 = ssub.s32 %s19, %s26
      %p28 = scmp.eq.s32.totalorder %s27, 0
      %s30 = sadd.s32 %s29, 1
      %s31 = scalar_select %p28, %s29, %s30
      %p34 = pneg %p28
      %p35 = scmp.eq.s32.totalorder %s19, 1
      %p36 = por %p34, %p35
      %p37 = scmp.ne.s32.totalorder %s29, %s32
      %p38 = scmp.eq.s32.totalorder %s19, 0
      %p39 = por %p37, %p38
      %p40 = scmp.ne.s32.totalorder %s29, %s32
      %p41 = scmp.eq.s32.totalorder %s24, 1
      %p42 = por %p40, %p41
      %p43 = scmp.ne.s32.totalorder %s32, %s33
      %p44 = scmp.eq.s32.totalorder %s24, 0
      %p45 = por %p43, %p44
      %p46 = scmp.ne.s32.totalorder %s32, %s33
      %p47 = scmp.eq.s32.totalorder %s25, 1
      %p48 = por %p46, %p47
      %p50 = scmp.ne.s32.totalorder %s33, %s49
      %p51 = scmp.eq.s32.totalorder %s25, 0
      %p52 = por %p50, %p51
      %s54 = sadd.s32 %s53, 1
      %p57 = scmp.eq.s32.totalorder %s19, 1
      %p58 = scmp.ne.s32.totalorder %s53, %s55
      %p59 = scmp.eq.s32.totalorder %s19, 0
      %p60 = por %p58, %p59
      %p61 = scmp.ne.s32.totalorder %s53, %s55
      %p62 = scmp.eq.s32.totalorder %s24, 1
      %p63 = por %p61, %p62
      %p64 = scmp.ne.s32.totalorder %s55, %s56
      %p65 = scmp.eq.s32.totalorder %s24, 0
      %p66 = por %p64, %p65
      %p67 = scmp.ne.s32.totalorder %s55, %s56
      %p68 = scmp.eq.s32.totalorder %s25, 1
      %p69 = por %p67, %p68
      %p71 = scmp.ne.s32.totalorder %s56, %s70
      %p72 = scmp.eq.s32.totalorder %s25, 0
      %p73 = por %p71, %p72
      %s75 = sadd.s32 %s74, 1
      %p78 = scmp.eq.s32.totalorder %s19, 1
      %p79 = scmp.ne.s32.totalorder %s74, %s76
      %p80 = scmp.eq.s32.totalorder %s19, 0
      %p81 = por %p79, %p80
      %p82 = scmp.ne.s32.totalorder %s74, %s76
      %p83 = scmp.eq.s32.totalorder %s24, 1
      %p84 = por %p82, %p83
      %p85 = scmp.ne.s32.totalorder %s76, %s77
      %p86 = scmp.eq.s32.totalorder %s24, 0
      %p87 = por %p85, %p86
      %p88 = scmp.ne.s32.totalorder %s76, %s77
      %p89 = scmp.eq.s32.totalorder %s25, 1
      %p90 = por %p88, %p89
      %p92 = scmp.ne.s32.totalorder %s77, %s91
      %p93 = scmp.eq.s32.totalorder %s25, 0
      %p94 = por %p92, %p93
      %s96 = sadd.s32 %s95, 1
      %p99 = scmp.eq.s32.totalorder %s19, 1
      %p100 = scmp.ne.s32.totalorder %s95, %s97
      %p101 = scmp.eq.s32.totalorder %s19, 0
      %p102 = por %p100, %p101
      %p103 = scmp.ne.s32.totalorder %s95, %s97
      %p104 = scmp.eq.s32.totalorder %s24, 1
      %p105 = por %p103, %p104
      %p106 = scmp.ne.s32.totalorder %s97, %s98
      %p107 = scmp.eq.s32.totalorder %s24, 0
      %p108 = por %p106, %p107
      %p109 = scmp.ne.s32.totalorder %s97, %s98
      %p110 = scmp.eq.s32.totalorder %s25, 1
      %p111 = por %p109, %p110
      %p113 = scmp.ne.s32.totalorder %s98, %s112
      %p114 = scmp.eq.s32.totalorder %s25, 0
      %p115 = por %p113, %p114
      %s117 = sadd.s32 %s116, 1
      %p120 = scmp.eq.s32.totalorder %s19, 1
      %p121 = scmp.ne.s32.totalorder %s116, %s118
      %p122 = scmp.eq.s32.totalorder %s19, 0
      %p123 = por %p121, %p122
      %p124 = scmp.ne.s32.totalorder %s116, %s118
      %p125 = scmp.eq.s32.totalorder %s24, 1
      %p126 = por %p124, %p125
      %p127 = scmp.ne.s32.totalorder %s118, %s119
      %p128 = scmp.eq.s32.totalorder %s24, 0
      %p129 = por %p127, %p128
      %p130 = scmp.ne.s32.totalorder %s118, %s119
      %p131 = scmp.eq.s32.totalorder %s25, 1
      %p132 = por %p130, %p131
      %p134 = scmp.ne.s32.totalorder %s119, %s133
      %p135 = scmp.eq.s32.totalorder %s25, 0
      %p136 = por %p134, %p135
      %s137 = ssub.s32 %s19, %s26
      %p138 = scmp.eq.s32.totalorder %s137, 0
      %s140 = sadd.s32 %s139, 1
      %s141 = scalar_select %p138, %s139, %s140
      %p144 = pneg %p138
      %p145 = scmp.eq.s32.totalorder %s19, 1
      %p146 = por %p144, %p145
      %p147 = scmp.ne.s32.totalorder %s139, %s142
      %p148 = scmp.eq.s32.totalorder %s19, 0
      %p149 = por %p147, %p148
      %p150 = scmp.ne.s32.totalorder %s139, %s142
      %p151 = scmp.eq.s32.totalorder %s24, 1
      %p152 = por %p150, %p151
      %p153 = scmp.ne.s32.totalorder %s142, %s143
      %p154 = scmp.eq.s32.totalorder %s24, 0
      %p155 = por %p153, %p154
      %p156 = scmp.ne.s32.totalorder %s142, %s143
      %p157 = scmp.eq.s32.totalorder %s25, 1
      %p158 = por %p156, %p157
      %p160 = scmp.ne.s32.totalorder %s143, %s159
      %p161 = scmp.eq.s32.totalorder %s25, 0
      %p162 = por %p160, %p161
      %p163 = scmp.le.s32.totalorder 1, %s19
      %p164 = scmp.lt.s32.totalorder %s19, 3
      %p165 = pnand %p163, %p164
      %p166 = pneg %p165
      // Predicated region
      $region9: #{mlp_block.1} parent=5 // pred_check
        _
      $region10: #{mlp_block.1} parent=5 // pred_check_branch
        %168 = sbr.rel (%p165) target = $region12
      $region11: #{mlp_block.1} parent=5 // pred_region
        %s169 = ssub.s32 %s19, 1
        // Predicated region
        $region13: #{mlp_block.1} parent=11 // pred_check
          %p170 = pneg %p66
        $region14: #{mlp_block.1} parent=11 // pred_check_branch
          %172 = sbr.rel (%p170) target = $region16
        $region15: #{mlp_block.1} parent=11 // pred_region
          %174 = vsyncadd [#allocation6], 0
          %s175 = sshll.u32 %s1, 4
          %s176 = int_to_ptr.hbm [resolvable:$true] %s175
          %s177 = sshll.u32 [#allocation5], 4
          %s178 = int_to_ptr.vmem [resolvable:$true] %s177
          %183 = dma.hbm_to_vmem [thread:$0]  %s176, 16384, %s178, [#allocation6], 512, 512, 32
        $region16: #{mlp_block.1} parent=11 // pred_fallthru
          _
        // Predicated region
        $region17: #{mlp_block.1} parent=11 // pred_check
          %p184 = pneg %p87
        $region18: #{mlp_block.1} parent=11 // pred_check_branch
          %186 = sbr.rel (%p184) target = $region20
        $region19: #{mlp_block.1} parent=11 // pred_region
          %188 = vsyncadd [#allocation6], 0
          %s190 = sshll.u32 %s2, 4
          %s191 = int_to_ptr.hbm [resolvable:$true] %s190
          %s192 = sshll.u32 [#allocation7], 4
          %s193 = int_to_ptr.vmem [resolvable:$true] %s192
          %195 = dma.hbm_to_vmem [thread:$0]  %s191, 64, %s193, [#allocation6]
        $region20: #{mlp_block.1} parent=11 // pred_fallthru
          _
        // Predicated region
        $region21: #{mlp_block.1} parent=11 // pred_check
          %p196 = pneg %p108
        $region22: #{mlp_block.1} parent=11 // pred_check_branch
          %198 = sbr.rel (%p196) target = $region24
        $region23: #{mlp_block.1} parent=11 // pred_region
          %200 = vsyncadd [#allocation9], 0
          %s201 = sshll.u32 %s3, 4
          %s202 = int_to_ptr.hbm [resolvable:$true] %s201
          %s203 = sshll.u32 [#allocation8], 4
          %s204 = int_to_ptr.vmem [resolvable:$true] %s203
          %209 = dma.hbm_to_vmem [thread:$0]  %s202, 16384, %s204, [#allocation9], 256, 256, 16
        $region24: #{mlp_block.1} parent=11 // pred_fallthru
          _
        // Predicated region
        $region25: #{mlp_block.1} parent=11 // pred_check
          %p210 = pneg %p129
        $region26: #{mlp_block.1} parent=11 // pred_check_branch
          %212 = sbr.rel (%p210) target = $region28
        $region27: #{mlp_block.1} parent=11 // pred_region
          %214 = vsyncadd [#allocation9], 0
          %s216 = sshll.u32 %s4, 4
          %s217 = int_to_ptr.hbm [resolvable:$true] %s216
          %s218 = sshll.u32 [#allocation10], 4
          %s219 = int_to_ptr.vmem [resolvable:$true] %s218
          %221 = dma.hbm_to_vmem [thread:$0]  %s217, 32, %s219, [#allocation9]
        $region28: #{mlp_block.1} parent=11 // pred_fallthru
          _
      $region12: #{mlp_block.1} parent=5 // pred_fallthru
        _
      %p222 = scmp.lt.s32.totalorder %s19, 2
      // Predicated region
      $region29: #{mlp_block.1} parent=5 // pred_check
        %p223 = pneg %p222
      $region30: #{mlp_block.1} parent=5 // pred_check_branch
        %225 = sbr.rel (%p223) target = $region32
      $region31: #{mlp_block.1} parent=5 // pred_region
        // Predicated region
        $region33: #{mlp_block.1} parent=31 // pred_check
          %p226 = pneg %p39
        $region34: #{mlp_block.1} parent=31 // pred_check_branch
          %228 = sbr.rel (%p226) target = $region36
        $region35: #{mlp_block.1} parent=31 // pred_region
          %s229 = sand.u32 %s29, 1
          %s230 = scalar_lea.sflag [#allocation3], %s229
          %s231 = sand.u32 %s29, 1
          %s232 = smul.addr %s231, 128
          %s233 = scalar_lea.vmem [#allocation2], %s232
          %s234 = smul.u32 8, %s19
          %236 = vsyncadd %s230, 0
          %s237 = smul.addr %s234, 2
          %s238 = smul.addr %s237, 8
          %s239 = scalar_lea.hbm %s0, %s238
          %s240 = sshll.u32 %s239, 4
          %s241 = int_to_ptr.hbm [resolvable:$true] %s240
          %s242 = sshll.u32 %s233, 4
          %s243 = int_to_ptr.vmem [resolvable:$true] %s242
          %248 = dma.hbm_to_vmem [thread:$0]  %s241, 2048, %s243, %s230, 256, 256, 16
        $region36: #{mlp_block.1} parent=31 // pred_fallthru
          _
      $region32: #{mlp_block.1} parent=5 // pred_fallthru
        _
      %p249 = scmp.le.s32.totalorder 1, %s19
      %p250 = scmp.lt.s32.totalorder %s19, 3
      %p251 = pnand %p249, %p250
      %p252 = pneg %p251
      // Predicated region
      $region37: #{mlp_block.1} parent=5 // pred_check
        _
      $region38: #{mlp_block.1} parent=5 // pred_check_branch
        %254 = sbr.rel (%p251) target = $region40
      $region39: #{mlp_block.1} parent=5 // pred_region
        %s255 = ssub.s32 %s19, 1
        %s256 = sand.u32 %s32, 1
        %s257 = scalar_lea.sflag [#allocation3], %s256
        %s258 = sand.u32 %s32, 1
        %s259 = smul.addr %s258, 128
        %s260 = scalar_lea.vmem [#allocation2], %s259
        // Predicated region
        $region41: #{mlp_block.1} parent=39 // pred_check
          %p261 = pneg %p45
        $region42: #{mlp_block.1} parent=39 // pred_check_branch
          %263 = sbr.rel (%p261) target = $region44
        $region43: #{mlp_block.1} parent=39 // pred_region
          %265 = dma.done %s257, 2048
        $region44: #{mlp_block.1} parent=39 // pred_fallthru
          _
        // Predicated region
        $region45: #{mlp_block.1} parent=39 // pred_check
          %p266 = pneg %p66
        $region46: #{mlp_block.1} parent=39 // pred_check_branch
          %268 = sbr.rel (%p266) target = $region48
        $region47: #{mlp_block.1} parent=39 // pred_region
          %270 = dma.done [#allocation6], 16384
        $region48: #{mlp_block.1} parent=39 // pred_fallthru
          _
        // Predicated region
        $region49: #{mlp_block.1} parent=39 // pred_check
          %p271 = pneg %p87
        $region50: #{mlp_block.1} parent=39 // pred_check_branch
          %273 = sbr.rel (%p271) target = $region52
        $region51: #{mlp_block.1} parent=39 // pred_region
          %275 = dma.done [#allocation6], 64
        $region52: #{mlp_block.1} parent=39 // pred_fallthru
          _
        // Predicated region
        $region53: #{mlp_block.1} parent=39 // pred_check
          %p276 = pneg %p108
        $region54: #{mlp_block.1} parent=39 // pred_check_branch
          %278 = sbr.rel (%p276) target = $region56
        $region55: #{mlp_block.1} parent=39 // pred_region
          %280 = dma.done [#allocation9], 16384
        $region56: #{mlp_block.1} parent=39 // pred_fallthru
          _
        // Predicated region
        $region57: #{mlp_block.1} parent=39 // pred_check
          %p281 = pneg %p129
        $region58: #{mlp_block.1} parent=39 // pred_check_branch
          %283 = sbr.rel (%p281) target = $region60
        $region59: #{mlp_block.1} parent=39 // pred_region
          %285 = dma.done [#allocation9], 32
        $region60: #{mlp_block.1} parent=39 // pred_fallthru
          _
        %s286 = sand.u32 %s32, 1
        %s287 = scalar_lea.sflag [#allocation3], %s286
        %s288 = sand.u32 %s32, 1
        %s289 = smul.addr %s288, 128
        %s290 = scalar_lea.vmem [#allocation2], %s289
        %p291 = pneg %p45
        %p292 = pneg %p42
        %p293 = pneg %p66
        %p294 = pneg %p63
        %p295 = pneg %p87
        %p296 = pneg %p84
        %p297 = pneg %p108
        %p298 = pneg %p105
        %p299 = pneg %p129
        %p300 = pneg %p126
        %p301 = pneg %p155
        %p302 = pneg %p152
        %s303 = sand.u32 %s142, 1
        %s304 = scalar_lea.sflag [#allocation4], %s303
        %s305 = sand.u32 %s142, 1
        %s306 = smul.addr %s305, 128
        %s307 = scalar_lea.vmem [#allocation11], %s306
        %s308 = smul.u32 8, %s24
        %s309 = smul.u32 8, %s24
        %v310 = vld [vmem:[%s260] sm:$0xff]
        %v311 = vld [vmem:[%s260 + $0x8] sm:$0xff]
        %v312 = vld [vmem:[%s260 + $0x10] sm:$0xff]
        %v313 = vld [vmem:[%s260 + $0x18] sm:$0xff]
        %v314 = vld [vmem:[%s260 + $0x20] sm:$0xff]
        %v315 = vld [vmem:[%s260 + $0x28] sm:$0xff]
        %v316 = vld [vmem:[%s260 + $0x30] sm:$0xff]
        %v317 = vld [vmem:[%s260 + $0x38] sm:$0xff]
        %v318 = vld [vmem:[%s260 + $0x40] sm:$0xff]
        %v319 = vld [vmem:[%s260 + $0x48] sm:$0xff]
        %v320 = vld [vmem:[%s260 + $0x50] sm:$0xff]
        %v321 = vld [vmem:[%s260 + $0x58] sm:$0xff]
        %v322 = vld [vmem:[%s260 + $0x60] sm:$0xff]
        %v323 = vld [vmem:[%s260 + $0x68] sm:$0xff]
        %v324 = vld [vmem:[%s260 + $0x70] sm:$0xff]
        %v325 = vld [vmem:[%s260 + $0x78] sm:$0xff]
        %v326 = vld [vmem:[#allocation5] sm:$0xff]
        %v327 = vld [vmem:[#allocation5 + $0x8] sm:$0xff]
        %v328 = vld [vmem:[#allocation5 + $0x10] sm:$0xff]
        %v329 = vld [vmem:[#allocation5 + $0x18] sm:$0xff]
        %v330 = vld [vmem:[#allocation5 + $0x20] sm:$0xff]
        %v331 = vld [vmem:[#allocation5 + $0x28] sm:$0xff]
        %v332 = vld [vmem:[#allocation5 + $0x30] sm:$0xff]
        %v333 = vld [vmem:[#allocation5 + $0x38] sm:$0xff]
        %v334 = vld [vmem:[#allocation5 + $0x40] sm:$0xff]
        %v335 = vld [vmem:[#allocation5 + $0x48] sm:$0xff]
        %v336 = vld [vmem:[#allocation5 + $0x50] sm:$0xff]
        %v337 = vld [vmem:[#allocation5 + $0x58] sm:$0xff]
        %v338 = vld [vmem:[#allocation5 + $0x60] sm:$0xff]
        %v339 = vld [vmem:[#allocation5 + $0x68] sm:$0xff]
        %v340 = vld [vmem:[#allocation5 + $0x70] sm:$0xff]
        %v341 = vld [vmem:[#allocation5 + $0x78] sm:$0xff]
        %v342 = vld [vmem:[#allocation5 + $0x80] sm:$0xff]
        %v343 = vld [vmem:[#allocation5 + $0x88] sm:$0xff]
        %v344 = vld [vmem:[#allocation5 + $0x90] sm:$0xff]
        %v345 = vld [vmem:[#allocation5 + $0x98] sm:$0xff]
        %v346 = vld [vmem:[#allocation5 + $0xa0] sm:$0xff]
        %v347 = vld [vmem:[#allocation5 + $0xa8] sm:$0xff]
        %v348 = vld [vmem:[#allocation5 + $0xb0] sm:$0xff]
        %v349 = vld [vmem:[#allocation5 + $0xb8] sm:$0xff]
        %v350 = vld [vmem:[#allocation5 + $0xc0] sm:$0xff]
        %v351 = vld [vmem:[#allocation5 + $0xc8] sm:$0xff]
        %v352 = vld [vmem:[#allocation5 + $0xd0] sm:$0xff]
        %v353 = vld [vmem:[#allocation5 + $0xd8] sm:$0xff]
        %v354 = vld [vmem:[#allocation5 + $0xe0] sm:$0xff]
        %v355 = vld [vmem:[#allocation5 + $0xe8] sm:$0xff]
        %v356 = vld [vmem:[#allocation5 + $0xf0] sm:$0xff]
        %v357 = vld [vmem:[#allocation5 + $0xf8] sm:$0xff]
        %v358 = vld [vmem:[#allocation5 + $0x100] sm:$0xff]
        %v359 = vld [vmem:[#allocation5 + $0x108] sm:$0xff]
        %v360 = vld [vmem:[#allocation5 + $0x110] sm:$0xff]
        %v361 = vld [vmem:[#allocation5 + $0x118] sm:$0xff]
        %v362 = vld [vmem:[#allocation5 + $0x120] sm:$0xff]
        %v363 = vld [vmem:[#allocation5 + $0x128] sm:$0xff]
        %v364 = vld [vmem:[#allocation5 + $0x130] sm:$0xff]
        %v365 = vld [vmem:[#allocation5 + $0x138] sm:$0xff]
        %v366 = vld [vmem:[#allocation5 + $0x140] sm:$0xff]
        %v367 = vld [vmem:[#allocation5 + $0x148] sm:$0xff]
        %v368 = vld [vmem:[#allocation5 + $0x150] sm:$0xff]
        %v369 = vld [vmem:[#allocation5 + $0x158] sm:$0xff]
        %v370 = vld [vmem:[#allocation5 + $0x160] sm:$0xff]
        %v371 = vld [vmem:[#allocation5 + $0x168] sm:$0xff]
        %v372 = vld [vmem:[#allocation5 + $0x170] sm:$0xff]
        %v373 = vld [vmem:[#allocation5 + $0x178] sm:$0xff]
        %v374 = vld [vmem:[#allocation5 + $0x180] sm:$0xff]
        %v375 = vld [vmem:[#allocation5 + $0x188] sm:$0xff]
        %v376 = vld [vmem:[#allocation5 + $0x190] sm:$0xff]
        %v377 = vld [vmem:[#allocation5 + $0x198] sm:$0xff]
        %v378 = vld [vmem:[#allocation5 + $0x1a0] sm:$0xff]
        %v379 = vld [vmem:[#allocation5 + $0x1a8] sm:$0xff]
        %v380 = vld [vmem:[#allocation5 + $0x1b0] sm:$0xff]
        %v381 = vld [vmem:[#allocation5 + $0x1b8] sm:$0xff]
        %v382 = vld [vmem:[#allocation5 + $0x1c0] sm:$0xff]
        %v383 = vld [vmem:[#allocation5 + $0x1c8] sm:$0xff]
        %v384 = vld [vmem:[#allocation5 + $0x1d0] sm:$0xff]
        %v385 = vld [vmem:[#allocation5 + $0x1d8] sm:$0xff]
        %v386 = vld [vmem:[#allocation5 + $0x1e0] sm:$0xff]
        %v387 = vld [vmem:[#allocation5 + $0x1e8] sm:$0xff]
        %v388 = vld [vmem:[#allocation5 + $0x1f0] sm:$0xff]
        %v389 = vld [vmem:[#allocation5 + $0x1f8] sm:$0xff]
        %v390 = vld [vmem:[#allocation5 + $0x200] sm:$0xff]
        %v391 = vld [vmem:[#allocation5 + $0x208] sm:$0xff]
        %v392 = vld [vmem:[#allocation5 + $0x210] sm:$0xff]
        %v393 = vld [vmem:[#allocation5 + $0x218] sm:$0xff]
        %v394 = vld [vmem:[#allocation5 + $0x220] sm:$0xff]
        %v395 = vld [vmem:[#allocation5 + $0x228] sm:$0xff]
        %v396 = vld [vmem:[#allocation5 + $0x230] sm:$0xff]
        %v397 = vld [vmem:[#allocation5 + $0x238] sm:$0xff]
        %v398 = vld [vmem:[#allocation5 + $0x240] sm:$0xff]
        %v399 = vld [vmem:[#allocation5 + $0x248] sm:$0xff]
        %v400 = vld [vmem:[#allocation5 + $0x250] sm:$0xff]
        %v401 = vld [vmem:[#allocation5 + $0x258] sm:$0xff]
        %v402 = vld [vmem:[#allocation5 + $0x260] sm:$0xff]
        %v403 = vld [vmem:[#allocation5 + $0x268] sm:$0xff]
        %v404 = vld [vmem:[#allocation5 + $0x270] sm:$0xff]
        %v405 = vld [vmem:[#allocation5 + $0x278] sm:$0xff]
        %v406 = vld [vmem:[#allocation5 + $0x280] sm:$0xff]
        %v407 = vld [vmem:[#allocation5 + $0x288] sm:$0xff]
        %v408 = vld [vmem:[#allocation5 + $0x290] sm:$0xff]
        %v409 = vld [vmem:[#allocation5 + $0x298] sm:$0xff]
        %v410 = vld [vmem:[#allocation5 + $0x2a0] sm:$0xff]
        %v411 = vld [vmem:[#allocation5 + $0x2a8] sm:$0xff]
        %v412 = vld [vmem:[#allocation5 + $0x2b0] sm:$0xff]
        %v413 = vld [vmem:[#allocation5 + $0x2b8] sm:$0xff]
        %v414 = vld [vmem:[#allocation5 + $0x2c0] sm:$0xff]
        %v415 = vld [vmem:[#allocation5 + $0x2c8] sm:$0xff]
        %v416 = vld [vmem:[#allocation5 + $0x2d0] sm:$0xff]
        %v417 = vld [vmem:[#allocation5 + $0x2d8] sm:$0xff]
        %v418 = vld [vmem:[#allocation5 + $0x2e0] sm:$0xff]
        %v419 = vld [vmem:[#allocation5 + $0x2e8] sm:$0xff]
        %v420 = vld [vmem:[#allocation5 + $0x2f0] sm:$0xff]
        %v421 = vld [vmem:[#allocation5 + $0x2f8] sm:$0xff]
        %v422 = vld [vmem:[#allocation5 + $0x300] sm:$0xff]
        %v423 = vld [vmem:[#allocation5 + $0x308] sm:$0xff]
        %v424 = vld [vmem:[#allocation5 + $0x310] sm:$0xff]
        %v425 = vld [vmem:[#allocation5 + $0x318] sm:$0xff]
        %v426 = vld [vmem:[#allocation5 + $0x320] sm:$0xff]
        %v427 = vld [vmem:[#allocation5 + $0x328] sm:$0xff]
        %v428 = vld [vmem:[#allocation5 + $0x330] sm:$0xff]
        %v429 = vld [vmem:[#allocation5 + $0x338] sm:$0xff]
        %v430 = vld [vmem:[#allocation5 + $0x340] sm:$0xff]
        %v431 = vld [vmem:[#allocation5 + $0x348] sm:$0xff]
        %v432 = vld [vmem:[#allocation5 + $0x350] sm:$0xff]
        %v433 = vld [vmem:[#allocation5 + $0x358] sm:$0xff]
        %v434 = vld [vmem:[#allocation5 + $0x360] sm:$0xff]
        %v435 = vld [vmem:[#allocation5 + $0x368] sm:$0xff]
        %v436 = vld [vmem:[#allocation5 + $0x370] sm:$0xff]
        %v437 = vld [vmem:[#allocation5 + $0x378] sm:$0xff]
        %v438 = vld [vmem:[#allocation5 + $0x380] sm:$0xff]
        %v439 = vld [vmem:[#allocation5 + $0x388] sm:$0xff]
        %v440 = vld [vmem:[#allocation5 + $0x390] sm:$0xff]
        %v441 = vld [vmem:[#allocation5 + $0x398] sm:$0xff]
        %v442 = vld [vmem:[#allocation5 + $0x3a0] sm:$0xff]
        %v443 = vld [vmem:[#allocation5 + $0x3a8] sm:$0xff]
        %v444 = vld [vmem:[#allocation5 + $0x3b0] sm:$0xff]
        %v445 = vld [vmem:[#allocation5 + $0x3b8] sm:$0xff]
        %v446 = vld [vmem:[#allocation5 + $0x3c0] sm:$0xff]
        %v447 = vld [vmem:[#allocation5 + $0x3c8] sm:$0xff]
        %v448 = vld [vmem:[#allocation5 + $0x3d0] sm:$0xff]
        %v449 = vld [vmem:[#allocation5 + $0x3d8] sm:$0xff]
        %v450 = vld [vmem:[#allocation5 + $0x3e0] sm:$0xff]
        %v451 = vld [vmem:[#allocation5 + $0x3e8] sm:$0xff]
        %v452 = vld [vmem:[#allocation5 + $0x3f0] sm:$0xff]
        %v453 = vld [vmem:[#allocation5 + $0x3f8] sm:$0xff]
        %v454 = vld [vmem:[#allocation7] sm:$0xf]
        %v456 = vperm.slane %v454, 0
        %v457 = vperm.slane %v454, 1
        %v458 = vperm.slane %v454, 2
        %v459 = vperm.slane %v454, 3
        %464 = vmatpush.msra.mxu0 %v386
        %465 = vmatpush.msra.mxu0 %v382
        %466 = vmatpush.msra.mxu0 %v378
        %467 = vmatpush.msra.mxu0 %v374
        %468 = vmatpush.msra.mxu0 %v370
        %469 = vmatpush.msra.mxu0 %v366
        %470 = vmatpush.msra.mxu0 %v362
        %471 = vmatpush.msra.mxu0 %v358
        %472 = vmatpush.msra.mxu0 %v354
        %473 = vmatpush.msra.mxu0 %v350
        %474 = vmatpush.msra.mxu0 %v346
        %475 = vmatpush.msra.mxu0 %v342
        %476 = vmatpush.msra.mxu0 %v338
        %477 = vmatpush.msra.mxu0 %v334
        %478 = vmatpush.msra.mxu0 %v330
        %479 = vmatpush.msra.mxu0 %v326
        %480 = vmatmul.f32.gmra.mxu0 %v310
        %v481 = vpop.f32.mrf.mxu0
        %v482 = vadd.f32 %v456, %v481
        %483 = vmatmul.f32.gmra.mxu0 %v312
        %v484 = vpop.f32.mrf.mxu0
        %v485 = vadd.f32 %v456, %v484
        %486 = vmatmul.f32.gmra.mxu0 %v314
        %v487 = vpop.f32.mrf.mxu0
        %v488 = vadd.f32 %v456, %v487
        %489 = vmatmul.f32.gmra.mxu0 %v316
        %v490 = vpop.f32.mrf.mxu0
        %v491 = vadd.f32 %v456, %v490
        %492 = vmatmul.f32.gmra.mxu0 %v318
        %v493 = vpop.f32.mrf.mxu0
        %v494 = vadd.f32 %v456, %v493
        %495 = vmatmul.f32.gmra.mxu0 %v320
        %v496 = vpop.f32.mrf.mxu0
        %v497 = vadd.f32 %v456, %v496
        %498 = vmatmul.f32.gmra.mxu0 %v322
        %v499 = vpop.f32.mrf.mxu0
        %v500 = vadd.f32 %v456, %v499
        %501 = vmatmul.f32.gmra.mxu0 %v324
        %v502 = vpop.f32.mrf.mxu0
        %v503 = vadd.f32 %v456, %v502
        %504 = vdwg.mxu0
        %505 = vmatpush.msra.mxu0 %v450
        %506 = vmatpush.msra.mxu0 %v446
        %507 = vmatpush.msra.mxu0 %v442
        %508 = vmatpush.msra.mxu0 %v438
        %509 = vmatpush.msra.mxu0 %v434
        %510 = vmatpush.msra.mxu0 %v430
        %511 = vmatpush.msra.mxu0 %v426
        %512 = vmatpush.msra.mxu0 %v422
        %513 = vmatpush.msra.mxu0 %v418
        %514 = vmatpush.msra.mxu0 %v414
        %515 = vmatpush.msra.mxu0 %v410
        %516 = vmatpush.msra.mxu0 %v406
        %517 = vmatpush.msra.mxu0 %v402
        %518 = vmatpush.msra.mxu0 %v398
        %519 = vmatpush.msra.mxu0 %v394
        %520 = vmatpush.msra.mxu0 %v390
        %521 = vmatmul.f32.gmra.mxu0 %v311
        %v522 = vpop.f32.mrf.mxu0
        %v523 = vadd.f32 %v482, %v522
        %524 = vmatmul.f32.gmra.mxu0 %v313
        %v525 = vpop.f32.mrf.mxu0
        %v526 = vadd.f32 %v485, %v525
        %527 = vmatmul.f32.gmra.mxu0 %v315
        %v528 = vpop.f32.mrf.mxu0
        %v529 = vadd.f32 %v488, %v528
        %530 = vmatmul.f32.gmra.mxu0 %v317
        %v531 = vpop.f32.mrf.mxu0
        %v532 = vadd.f32 %v491, %v531
        %533 = vmatmul.f32.gmra.mxu0 %v319
        %v534 = vpop.f32.mrf.mxu0
        %v535 = vadd.f32 %v494, %v534
        %536 = vmatmul.f32.gmra.mxu0 %v321
        %v537 = vpop.f32.mrf.mxu0
        %v538 = vadd.f32 %v497, %v537
        %539 = vmatmul.f32.gmra.mxu0 %v323
        %v540 = vpop.f32.mrf.mxu0
        %v541 = vadd.f32 %v500, %v540
        %542 = vmatmul.f32.gmra.mxu0 %v325
        %v543 = vpop.f32.mrf.mxu0
        %v544 = vadd.f32 %v503, %v543
        %545 = vdwg.mxu0
        %546 = vmatpush.msra.mxu0 %v387
        %547 = vmatpush.msra.mxu0 %v383
        %548 = vmatpush.msra.mxu0 %v379
        %549 = vmatpush.msra.mxu0 %v375
        %550 = vmatpush.msra.mxu0 %v371
        %551 = vmatpush.msra.mxu0 %v367
        %552 = vmatpush.msra.mxu0 %v363
        %553 = vmatpush.msra.mxu0 %v359
        %554 = vmatpush.msra.mxu0 %v355
        %555 = vmatpush.msra.mxu0 %v351
        %556 = vmatpush.msra.mxu0 %v347
        %557 = vmatpush.msra.mxu0 %v343
        %558 = vmatpush.msra.mxu0 %v339
        %559 = vmatpush.msra.mxu0 %v335
        %560 = vmatpush.msra.mxu0 %v331
        %561 = vmatpush.msra.mxu0 %v327
        %562 = vmatmul.f32.gmra.mxu0 %v310
        %v563 = vpop.f32.mrf.mxu0
        %v564 = vadd.f32 %v457, %v563
        %565 = vmatmul.f32.gmra.mxu0 %v312
        %v566 = vpop.f32.mrf.mxu0
        %v567 = vadd.f32 %v457, %v566
        %568 = vmatmul.f32.gmra.mxu0 %v314
        %v569 = vpop.f32.mrf.mxu0
        %v570 = vadd.f32 %v457, %v569
        %571 = vmatmul.f32.gmra.mxu0 %v316
        %v572 = vpop.f32.mrf.mxu0
        %v573 = vadd.f32 %v457, %v572
        %574 = vmatmul.f32.gmra.mxu0 %v318
        %v575 = vpop.f32.mrf.mxu0
        %v576 = vadd.f32 %v457, %v575
        %577 = vmatmul.f32.gmra.mxu0 %v320
        %v578 = vpop.f32.mrf.mxu0
        %v579 = vadd.f32 %v457, %v578
        %580 = vmatmul.f32.gmra.mxu0 %v322
        %v581 = vpop.f32.mrf.mxu0
        %v582 = vadd.f32 %v457, %v581
        %583 = vmatmul.f32.gmra.mxu0 %v324
        %v584 = vpop.f32.mrf.mxu0
        %v585 = vadd.f32 %v457, %v584
        %586 = vdwg.mxu0
        %587 = vmatpush.msra.mxu0 %v451
        %588 = vmatpush.msra.mxu0 %v447
        %589 = vmatpush.msra.mxu0 %v443
        %590 = vmatpush.msra.mxu0 %v439
        %591 = vmatpush.msra.mxu0 %v435
        %592 = vmatpush.msra.mxu0 %v431
        %593 = vmatpush.msra.mxu0 %v427
        %594 = vmatpush.msra.mxu0 %v423
        %595 = vmatpush.msra.mxu0 %v419
        %596 = vmatpush.msra.mxu0 %v415
        %597 = vmatpush.msra.mxu0 %v411
        %598 = vmatpush.msra.mxu0 %v407
        %599 = vmatpush.msra.mxu0 %v403
        %600 = vmatpush.msra.mxu0 %v399
        %601 = vmatpush.msra.mxu0 %v395
        %602 = vmatpush.msra.mxu0 %v391
        %603 = vmatmul.f32.gmra.mxu0 %v311
        %v604 = vpop.f32.mrf.mxu0
        %v605 = vadd.f32 %v564, %v604
        %606 = vmatmul.f32.gmra.mxu0 %v313
        %v607 = vpop.f32.mrf.mxu0
        %v608 = vadd.f32 %v567, %v607
        %609 = vmatmul.f32.gmra.mxu0 %v315
        %v610 = vpop.f32.mrf.mxu0
        %v611 = vadd.f32 %v570, %v610
        %612 = vmatmul.f32.gmra.mxu0 %v317
        %v613 = vpop.f32.mrf.mxu0
        %v614 = vadd.f32 %v573, %v613
        %615 = vmatmul.f32.gmra.mxu0 %v319
        %v616 = vpop.f32.mrf.mxu0
        %v617 = vadd.f32 %v576, %v616
        %618 = vmatmul.f32.gmra.mxu0 %v321
        %v619 = vpop.f32.mrf.mxu0
        %v620 = vadd.f32 %v579, %v619
        %621 = vmatmul.f32.gmra.mxu0 %v323
        %v622 = vpop.f32.mrf.mxu0
        %v623 = vadd.f32 %v582, %v622
        %624 = vmatmul.f32.gmra.mxu0 %v325
        %v625 = vpop.f32.mrf.mxu0
        %v626 = vadd.f32 %v585, %v625
        %627 = vdwg.mxu0
        %628 = vmatpush.msra.mxu0 %v388
        %629 = vmatpush.msra.mxu0 %v384
        %630 = vmatpush.msra.mxu0 %v380
        %631 = vmatpush.msra.mxu0 %v376
        %632 = vmatpush.msra.mxu0 %v372
        %633 = vmatpush.msra.mxu0 %v368
        %634 = vmatpush.msra.mxu0 %v364
        %635 = vmatpush.msra.mxu0 %v360
        %636 = vmatpush.msra.mxu0 %v356
        %637 = vmatpush.msra.mxu0 %v352
        %638 = vmatpush.msra.mxu0 %v348
        %639 = vmatpush.msra.mxu0 %v344
        %640 = vmatpush.msra.mxu0 %v340
        %641 = vmatpush.msra.mxu0 %v336
        %642 = vmatpush.msra.mxu0 %v332
        %643 = vmatpush.msra.mxu0 %v328
        %644 = vmatmul.f32.gmra.mxu0 %v310
        %v645 = vpop.f32.mrf.mxu0
        %v646 = vadd.f32 %v458, %v645
        %647 = vmatmul.f32.gmra.mxu0 %v312
        %v648 = vpop.f32.mrf.mxu0
        %v649 = vadd.f32 %v458, %v648
        %650 = vmatmul.f32.gmra.mxu0 %v314
        %v651 = vpop.f32.mrf.mxu0
        %v652 = vadd.f32 %v458, %v651
        %653 = vmatmul.f32.gmra.mxu0 %v316
        %v654 = vpop.f32.mrf.mxu0
        %v655 = vadd.f32 %v458, %v654
        %656 = vmatmul.f32.gmra.mxu0 %v318
        %v657 = vpop.f32.mrf.mxu0
        %v658 = vadd.f32 %v458, %v657
        %659 = vmatmul.f32.gmra.mxu0 %v320
        %v660 = vpop.f32.mrf.mxu0
        %v661 = vadd.f32 %v458, %v660
        %662 = vmatmul.f32.gmra.mxu0 %v322
        %v663 = vpop.f32.mrf.mxu0
        %v664 = vadd.f32 %v458, %v663
        %665 = vmatmul.f32.gmra.mxu0 %v324
        %v666 = vpop.f32.mrf.mxu0
        %v667 = vadd.f32 %v458, %v666
        %668 = vdwg.mxu0
        %669 = vmatpush.msra.mxu0 %v452
        %670 = vmatpush.msra.mxu0 %v448
        %671 = vmatpush.msra.mxu0 %v444
        %672 = vmatpush.msra.mxu0 %v440
        %673 = vmatpush.msra.mxu0 %v436
        %674 = vmatpush.msra.mxu0 %v432
        %675 = vmatpush.msra.mxu0 %v428
        %676 = vmatpush.msra.mxu0 %v424
        %677 = vmatpush.msra.mxu0 %v420
        %678 = vmatpush.msra.mxu0 %v416
        %679 = vmatpush.msra.mxu0 %v412
        %680 = vmatpush.msra.mxu0 %v408
        %681 = vmatpush.msra.mxu0 %v404
        %682 = vmatpush.msra.mxu0 %v400
        %683 = vmatpush.msra.mxu0 %v396
        %684 = vmatpush.msra.mxu0 %v392
        %685 = vmatmul.f32.gmra.mxu0 %v311
        %v686 = vpop.f32.mrf.mxu0
        %v687 = vadd.f32 %v646, %v686
        %688 = vmatmul.f32.gmra.mxu0 %v313
        %v689 = vpop.f32.mrf.mxu0
        %v690 = vadd.f32 %v649, %v689
        %691 = vmatmul.f32.gmra.mxu0 %v315
        %v692 = vpop.f32.mrf.mxu0
        %v693 = vadd.f32 %v652, %v692
        %694 = vmatmul.f32.gmra.mxu0 %v317
        %v695 = vpop.f32.mrf.mxu0
        %v696 = vadd.f32 %v655, %v695
        %697 = vmatmul.f32.gmra.mxu0 %v319
        %v698 = vpop.f32.mrf.mxu0
        %v699 = vadd.f32 %v658, %v698
        %700 = vmatmul.f32.gmra.mxu0 %v321
        %v701 = vpop.f32.mrf.mxu0
        %v702 = vadd.f32 %v661, %v701
        %703 = vmatmul.f32.gmra.mxu0 %v323
        %v704 = vpop.f32.mrf.mxu0
        %v705 = vadd.f32 %v664, %v704
        %706 = vmatmul.f32.gmra.mxu0 %v325
        %v707 = vpop.f32.mrf.mxu0
        %v708 = vadd.f32 %v667, %v707
        %709 = vdwg.mxu0
        %710 = vmatpush.msra.mxu0 %v389
        %711 = vmatpush.msra.mxu0 %v385
        %712 = vmatpush.msra.mxu0 %v381
        %713 = vmatpush.msra.mxu0 %v377
        %714 = vmatpush.msra.mxu0 %v373
        %715 = vmatpush.msra.mxu0 %v369
        %716 = vmatpush.msra.mxu0 %v365
        %717 = vmatpush.msra.mxu0 %v361
        %718 = vmatpush.msra.mxu0 %v357
        %719 = vmatpush.msra.mxu0 %v353
        %720 = vmatpush.msra.mxu0 %v349
        %721 = vmatpush.msra.mxu0 %v345
        %722 = vmatpush.msra.mxu0 %v341
        %723 = vmatpush.msra.mxu0 %v337
        %724 = vmatpush.msra.mxu0 %v333
        %725 = vmatpush.msra.mxu0 %v329
        %726 = vmatmul.f32.gmra.mxu0 %v310
        %v727 = vpop.f32.mrf.mxu0
        %v728 = vadd.f32 %v459, %v727
        %729 = vmatmul.f32.gmra.mxu0 %v312
        %v730 = vpop.f32.mrf.mxu0
        %v731 = vadd.f32 %v459, %v730
        %732 = vmatmul.f32.gmra.mxu0 %v314
        %v733 = vpop.f32.mrf.mxu0
        %v734 = vadd.f32 %v459, %v733
        %735 = vmatmul.f32.gmra.mxu0 %v316
        %v736 = vpop.f32.mrf.mxu0
        %v737 = vadd.f32 %v459, %v736
        %738 = vmatmul.f32.gmra.mxu0 %v318
        %v739 = vpop.f32.mrf.mxu0
        %v740 = vadd.f32 %v459, %v739
        %741 = vmatmul.f32.gmra.mxu0 %v320
        %v742 = vpop.f32.mrf.mxu0
        %v743 = vadd.f32 %v459, %v742
        %744 = vmatmul.f32.gmra.mxu0 %v322
        %v745 = vpop.f32.mrf.mxu0
        %v746 = vadd.f32 %v459, %v745
        %747 = vmatmul.f32.gmra.mxu0 %v324
        %v748 = vpop.f32.mrf.mxu0
        %v749 = vadd.f32 %v459, %v748
        %750 = vdwg.mxu0
        %751 = vmatpush.msra.mxu0 %v453
        %752 = vmatpush.msra.mxu0 %v449
        %753 = vmatpush.msra.mxu0 %v445
        %754 = vmatpush.msra.mxu0 %v441
        %755 = vmatpush.msra.mxu0 %v437
        %756 = vmatpush.msra.mxu0 %v433
        %757 = vmatpush.msra.mxu0 %v429
        %758 = vmatpush.msra.mxu0 %v425
        %759 = vmatpush.msra.mxu0 %v421
        %760 = vmatpush.msra.mxu0 %v417
        %761 = vmatpush.msra.mxu0 %v413
        %762 = vmatpush.msra.mxu0 %v409
        %763 = vmatpush.msra.mxu0 %v405
        %764 = vmatpush.msra.mxu0 %v401
        %765 = vmatpush.msra.mxu0 %v397
        %766 = vmatpush.msra.mxu0 %v393
        %767 = vmatmul.f32.gmra.mxu0 %v311
        %v768 = vpop.f32.mrf.mxu0
        %v769 = vadd.f32 %v728, %v768
        %770 = vmatmul.f32.gmra.mxu0 %v313
        %v771 = vpop.f32.mrf.mxu0
        %v772 = vadd.f32 %v731, %v771
        %773 = vmatmul.f32.gmra.mxu0 %v315
        %v774 = vpop.f32.mrf.mxu0
        %v775 = vadd.f32 %v734, %v774
        %776 = vmatmul.f32.gmra.mxu0 %v317
        %v777 = vpop.f32.mrf.mxu0
        %v778 = vadd.f32 %v737, %v777
        %779 = vmatmul.f32.gmra.mxu0 %v319
        %v780 = vpop.f32.mrf.mxu0
        %v781 = vadd.f32 %v740, %v780
        %782 = vmatmul.f32.gmra.mxu0 %v321
        %v783 = vpop.f32.mrf.mxu0
        %v784 = vadd.f32 %v743, %v783
        %785 = vmatmul.f32.gmra.mxu0 %v323
        %v786 = vpop.f32.mrf.mxu0
        %v787 = vadd.f32 %v746, %v786
        %788 = vmatmul.f32.gmra.mxu0 %v325
        %v789 = vpop.f32.mrf.mxu0
        %v790 = vadd.f32 %v749, %v789
        %791 = vdwg.mxu0
        %v792 = vmul.f32 %v523, 0.5
        %v793 = vmul.f32 %v605, 0.5
        %v794 = vmul.f32 %v687, 0.5
        %v795 = vmul.f32 %v769, 0.5
        %v796 = vmul.f32 %v526, 0.5
        %v797 = vmul.f32 %v608, 0.5
        %v798 = vmul.f32 %v690, 0.5
        %v799 = vmul.f32 %v772, 0.5
        %v800 = vmul.f32 %v529, 0.5
        %v801 = vmul.f32 %v611, 0.5
        %v802 = vmul.f32 %v693, 0.5
        %v803 = vmul.f32 %v775, 0.5
        %v804 = vmul.f32 %v532, 0.5
        %v805 = vmul.f32 %v614, 0.5
        %v806 = vmul.f32 %v696, 0.5
        %v807 = vmul.f32 %v778, 0.5
        %v808 = vmul.f32 %v535, 0.5
        %v809 = vmul.f32 %v617, 0.5
        %v810 = vmul.f32 %v699, 0.5
        %v811 = vmul.f32 %v781, 0.5
        %v812 = vmul.f32 %v538, 0.5
        %v813 = vmul.f32 %v620, 0.5
        %v814 = vmul.f32 %v702, 0.5
        %v815 = vmul.f32 %v784, 0.5
        %v816 = vmul.f32 %v541, 0.5
        %v817 = vmul.f32 %v623, 0.5
        %v818 = vmul.f32 %v705, 0.5
        %v819 = vmul.f32 %v787, 0.5
        %v820 = vmul.f32 %v544, 0.5
        %v821 = vmul.f32 %v626, 0.5
        %v822 = vmul.f32 %v708, 0.5
        %v823 = vmul.f32 %v790, 0.5
        %v824 = vmul.f32 %v523, 0.70710677
        %v825 = vmul.f32 %v605, 0.70710677
        %v826 = vmul.f32 %v687, 0.70710677
        %v827 = vmul.f32 %v769, 0.70710677
        %v828 = vmul.f32 %v526, 0.70710677
        %v829 = vmul.f32 %v608, 0.70710677
        %v830 = vmul.f32 %v690, 0.70710677
        %v831 = vmul.f32 %v772, 0.70710677
        %v832 = vmul.f32 %v529, 0.70710677
        %v833 = vmul.f32 %v611, 0.70710677
        %v834 = vmul.f32 %v693, 0.70710677
        %v835 = vmul.f32 %v775, 0.70710677
        %v836 = vmul.f32 %v532, 0.70710677
        %v837 = vmul.f32 %v614, 0.70710677
        %v838 = vmul.f32 %v696, 0.70710677
        %v839 = vmul.f32 %v778, 0.70710677
        %v840 = vmul.f32 %v535, 0.70710677
        %v841 = vmul.f32 %v617, 0.70710677
        %v842 = vmul.f32 %v699, 0.70710677
        %v843 = vmul.f32 %v781, 0.70710677
        %v844 = vmul.f32 %v538, 0.70710677
        %v845 = vmul.f32 %v620, 0.70710677
        %v846 = vmul.f32 %v702, 0.70710677
        %v847 = vmul.f32 %v784, 0.70710677
        %v848 = vmul.f32 %v541, 0.70710677
        %v849 = vmul.f32 %v623, 0.70710677
        %v850 = vmul.f32 %v705, 0.70710677
        %v851 = vmul.f32 %v787, 0.70710677
        %v852 = vmul.f32 %v544, 0.70710677
        %v853 = vmul.f32 %v626, 0.70710677
        %v854 = vmul.f32 %v708, 0.70710677
        %v855 = vmul.f32 %v790, 0.70710677
        %v856 = vand.u32 2147483647, %v824
        %v857 = vand.u32 2147483647, %v825
        %v858 = vand.u32 2147483647, %v826
        %v859 = vand.u32 2147483647, %v827
        %v860 = vand.u32 2147483647, %v828
        %v861 = vand.u32 2147483647, %v829
        %v862 = vand.u32 2147483647, %v830
        %v863 = vand.u32 2147483647, %v831
        %v864 = vand.u32 2147483647, %v832
        %v865 = vand.u32 2147483647, %v833
        %v866 = vand.u32 2147483647, %v834
        %v867 = vand.u32 2147483647, %v835
        %v868 = vand.u32 2147483647, %v836
        %v869 = vand.u32 2147483647, %v837
        %v870 = vand.u32 2147483647, %v838
        %v871 = vand.u32 2147483647, %v839
        %v872 = vand.u32 2147483647, %v840
        %v873 = vand.u32 2147483647, %v841
        %v874 = vand.u32 2147483647, %v842
        %v875 = vand.u32 2147483647, %v843
        %v876 = vand.u32 2147483647, %v844
        %v877 = vand.u32 2147483647, %v845
        %v878 = vand.u32 2147483647, %v846
        %v879 = vand.u32 2147483647, %v847
        %v880 = vand.u32 2147483647, %v848
        %v881 = vand.u32 2147483647, %v849
        %v882 = vand.u32 2147483647, %v850
        %v883 = vand.u32 2147483647, %v851
        %v884 = vand.u32 2147483647, %v852
        %v885 = vand.u32 2147483647, %v853
        %v886 = vand.u32 2147483647, %v854
        %v887 = vand.u32 2147483647, %v855
        %v888 = vmul.f32 %v856, 0.3275911
        %v889 = vmul.f32 %v857, 0.3275911
        %v890 = vmul.f32 %v858, 0.3275911
        %v891 = vmul.f32 %v859, 0.3275911
        %v892 = vmul.f32 %v860, 0.3275911
        %v893 = vmul.f32 %v861, 0.3275911
        %v894 = vmul.f32 %v862, 0.3275911
        %v895 = vmul.f32 %v863, 0.3275911
        %v896 = vmul.f32 %v864, 0.3275911
        %v897 = vmul.f32 %v865, 0.3275911
        %v898 = vmul.f32 %v866, 0.3275911
        %v899 = vmul.f32 %v867, 0.3275911
        %v900 = vmul.f32 %v868, 0.3275911
        %v901 = vmul.f32 %v869, 0.3275911
        %v902 = vmul.f32 %v870, 0.3275911
        %v903 = vmul.f32 %v871, 0.3275911
        %v904 = vmul.f32 %v872, 0.3275911
        %v905 = vmul.f32 %v873, 0.3275911
        %v906 = vmul.f32 %v874, 0.3275911
        %v907 = vmul.f32 %v875, 0.3275911
        %v908 = vmul.f32 %v876, 0.3275911
        %v909 = vmul.f32 %v877, 0.3275911
        %v910 = vmul.f32 %v878, 0.3275911
        %v911 = vmul.f32 %v879, 0.3275911
        %v912 = vmul.f32 %v880, 0.3275911
        %v913 = vmul.f32 %v881, 0.3275911
        %v914 = vmul.f32 %v882, 0.3275911
        %v915 = vmul.f32 %v883, 0.3275911
        %v916 = vmul.f32 %v884, 0.3275911
        %v917 = vmul.f32 %v885, 0.3275911
        %v918 = vmul.f32 %v886, 0.3275911
        %v919 = vmul.f32 %v887, 0.3275911
        %v920 = vadd.f32 %v888, 1.0
        %v921 = vadd.f32 %v889, 1.0
        %v922 = vadd.f32 %v890, 1.0
        %v923 = vadd.f32 %v891, 1.0
        %v924 = vadd.f32 %v892, 1.0
        %v925 = vadd.f32 %v893, 1.0
        %v926 = vadd.f32 %v894, 1.0
        %v927 = vadd.f32 %v895, 1.0
        %v928 = vadd.f32 %v896, 1.0
        %v929 = vadd.f32 %v897, 1.0
        %v930 = vadd.f32 %v898, 1.0
        %v931 = vadd.f32 %v899, 1.0
        %v932 = vadd.f32 %v900, 1.0
        %v933 = vadd.f32 %v901, 1.0
        %v934 = vadd.f32 %v902, 1.0
        %v935 = vadd.f32 %v903, 1.0
        %v936 = vadd.f32 %v904, 1.0
        %v937 = vadd.f32 %v905, 1.0
        %v938 = vadd.f32 %v906, 1.0
        %v939 = vadd.f32 %v907, 1.0
        %v940 = vadd.f32 %v908, 1.0
        %v941 = vadd.f32 %v909, 1.0
        %v942 = vadd.f32 %v910, 1.0
        %v943 = vadd.f32 %v911, 1.0
        %v944 = vadd.f32 %v912, 1.0
        %v945 = vadd.f32 %v913, 1.0
        %v946 = vadd.f32 %v914, 1.0
        %v947 = vadd.f32 %v915, 1.0
        %v948 = vadd.f32 %v916, 1.0
        %v949 = vadd.f32 %v917, 1.0
        %v950 = vadd.f32 %v918, 1.0
        %v951 = vadd.f32 %v919, 1.0
        %v952 = vrcp.pop %v920
        %v953 = vmul.f32 %v920, %v952
        %v954 = vsub.f32 1.0, %v953
        %v955 = vmul.f32 %v952, %v954
        %v956 = vadd.f32 %v952, %v955
        %vm957 = vweird.f32 %v920
        %vm958 = vweird.f32 %v952
        %vm959 = vmor %vm957, %vm958
        %v960 = vsel %vm959, %v952, %v956
        %v961 = vand.u32 2147483647, %v920
        %vm962 = vcmp.eq.f32.partialorder %v961, 8.507059e+37
        %v963 = vand.u32 %v920, 2147483648
        %v964 = vor.u32 1.1754944e-38, %v963
        %v965 = vsel %vm962, %v964, %v960
        %v966 = vmul.f32 1.0, %v965
        %v967 = vrcp.pop %v921
        %v968 = vmul.f32 %v921, %v967
        %v969 = vsub.f32 1.0, %v968
        %v970 = vmul.f32 %v967, %v969
        %v971 = vadd.f32 %v967, %v970
        %vm972 = vweird.f32 %v921
        %vm973 = vweird.f32 %v967
        %vm974 = vmor %vm972, %vm973
        %v975 = vsel %vm974, %v967, %v971
        %v976 = vand.u32 2147483647, %v921
        %vm977 = vcmp.eq.f32.partialorder %v976, 8.507059e+37
        %v978 = vand.u32 %v921, 2147483648
        %v979 = vor.u32 1.1754944e-38, %v978
        %v980 = vsel %vm977, %v979, %v975
        %v981 = vmul.f32 1.0, %v980
        %v982 = vrcp.pop %v922
        %v983 = vmul.f32 %v922, %v982
        %v984 = vsub.f32 1.0, %v983
        %v985 = vmul.f32 %v982, %v984
        %v986 = vadd.f32 %v982, %v985
        %vm987 = vweird.f32 %v922
        %vm988 = vweird.f32 %v982
        %vm989 = vmor %vm987, %vm988
        %v990 = vsel %vm989, %v982, %v986
        %v991 = vand.u32 2147483647, %v922
        %vm992 = vcmp.eq.f32.partialorder %v991, 8.507059e+37
        %v993 = vand.u32 %v922, 2147483648
        %v994 = vor.u32 1.1754944e-38, %v993
        %v995 = vsel %vm992, %v994, %v990
        %v996 = vmul.f32 1.0, %v995
        %v997 = vrcp.pop %v923
        %v998 = vmul.f32 %v923, %v997
        %v999 = vsub.f32 1.0, %v998
        %v1000 = vmul.f32 %v997, %v999
        %v1001 = vadd.f32 %v997, %v1000
        %vm1002 = vweird.f32 %v923
        %vm1003 = vweird.f32 %v997
        %vm1004 = vmor %vm1002, %vm1003
        %v1005 = vsel %vm1004, %v997, %v1001
        %v1006 = vand.u32 2147483647, %v923
        %vm1007 = vcmp.eq.f32.partialorder %v1006, 8.507059e+37
        %v1008 = vand.u32 %v923, 2147483648
        %v1009 = vor.u32 1.1754944e-38, %v1008
        %v1010 = vsel %vm1007, %v1009, %v1005
        %v1011 = vmul.f32 1.0, %v1010
        %v1012 = vrcp.pop %v924
        %v1013 = vmul.f32 %v924, %v1012
        %v1014 = vsub.f32 1.0, %v1013
        %v1015 = vmul.f32 %v1012, %v1014
        %v1016 = vadd.f32 %v1012, %v1015
        %vm1017 = vweird.f32 %v924
        %vm1018 = vweird.f32 %v1012
        %vm1019 = vmor %vm1017, %vm1018
        %v1020 = vsel %vm1019, %v1012, %v1016
        %v1021 = vand.u32 2147483647, %v924
        %vm1022 = vcmp.eq.f32.partialorder %v1021, 8.507059e+37
        %v1023 = vand.u32 %v924, 2147483648
        %v1024 = vor.u32 1.1754944e-38, %v1023
        %v1025 = vsel %vm1022, %v1024, %v1020
        %v1026 = vmul.f32 1.0, %v1025
        %v1027 = vrcp.pop %v925
        %v1028 = vmul.f32 %v925, %v1027
        %v1029 = vsub.f32 1.0, %v1028
        %v1030 = vmul.f32 %v1027, %v1029
        %v1031 = vadd.f32 %v1027, %v1030
        %vm1032 = vweird.f32 %v925
        %vm1033 = vweird.f32 %v1027
        %vm1034 = vmor %vm1032, %vm1033
        %v1035 = vsel %vm1034, %v1027, %v1031
        %v1036 = vand.u32 2147483647, %v925
        %vm1037 = vcmp.eq.f32.partialorder %v1036, 8.507059e+37
        %v1038 = vand.u32 %v925, 2147483648
        %v1039 = vor.u32 1.1754944e-38, %v1038
        %v1040 = vsel %vm1037, %v1039, %v1035
        %v1041 = vmul.f32 1.0, %v1040
        %v1042 = vrcp.pop %v926
        %v1043 = vmul.f32 %v926, %v1042
        %v1044 = vsub.f32 1.0, %v1043
        %v1045 = vmul.f32 %v1042, %v1044
        %v1046 = vadd.f32 %v1042, %v1045
        %vm1047 = vweird.f32 %v926
        %vm1048 = vweird.f32 %v1042
        %vm1049 = vmor %vm1047, %vm1048
        %v1050 = vsel %vm1049, %v1042, %v1046
        %v1051 = vand.u32 2147483647, %v926
        %vm1052 = vcmp.eq.f32.partialorder %v1051, 8.507059e+37
        %v1053 = vand.u32 %v926, 2147483648
        %v1054 = vor.u32 1.1754944e-38, %v1053
        %v1055 = vsel %vm1052, %v1054, %v1050
        %v1056 = vmul.f32 1.0, %v1055
        %v1057 = vrcp.pop %v927
        %v1058 = vmul.f32 %v927, %v1057
        %v1059 = vsub.f32 1.0, %v1058
        %v1060 = vmul.f32 %v1057, %v1059
        %v1061 = vadd.f32 %v1057, %v1060
        %vm1062 = vweird.f32 %v927
        %vm1063 = vweird.f32 %v1057
        %vm1064 = vmor %vm1062, %vm1063
        %v1065 = vsel %vm1064, %v1057, %v1061
        %v1066 = vand.u32 2147483647, %v927
        %vm1067 = vcmp.eq.f32.partialorder %v1066, 8.507059e+37
        %v1068 = vand.u32 %v927, 2147483648
        %v1069 = vor.u32 1.1754944e-38, %v1068
        %v1070 = vsel %vm1067, %v1069, %v1065
        %v1071 = vmul.f32 1.0, %v1070
        %v1072 = vrcp.pop %v928
        %v1073 = vmul.f32 %v928, %v1072
        %v1074 = vsub.f32 1.0, %v1073
        %v1075 = vmul.f32 %v1072, %v1074
        %v1076 = vadd.f32 %v1072, %v1075
        %vm1077 = vweird.f32 %v928
        %vm1078 = vweird.f32 %v1072
        %vm1079 = vmor %vm1077, %vm1078
        %v1080 = vsel %vm1079, %v1072, %v1076
        %v1081 = vand.u32 2147483647, %v928
        %vm1082 = vcmp.eq.f32.partialorder %v1081, 8.507059e+37
        %v1083 = vand.u32 %v928, 2147483648
        %v1084 = vor.u32 1.1754944e-38, %v1083
        %v1085 = vsel %vm1082, %v1084, %v1080
        %v1086 = vmul.f32 1.0, %v1085
        %v1087 = vrcp.pop %v929
        %v1088 = vmul.f32 %v929, %v1087
        %v1089 = vsub.f32 1.0, %v1088
        %v1090 = vmul.f32 %v1087, %v1089
        %v1091 = vadd.f32 %v1087, %v1090
        %vm1092 = vweird.f32 %v929
        %vm1093 = vweird.f32 %v1087
        %vm1094 = vmor %vm1092, %vm1093
        %v1095 = vsel %vm1094, %v1087, %v1091
        %v1096 = vand.u32 2147483647, %v929
        %vm1097 = vcmp.eq.f32.partialorder %v1096, 8.507059e+37
        %v1098 = vand.u32 %v929, 2147483648
        %v1099 = vor.u32 1.1754944e-38, %v1098
        %v1100 = vsel %vm1097, %v1099, %v1095
        %v1101 = vmul.f32 1.0, %v1100
        %v1102 = vrcp.pop %v930
        %v1103 = vmul.f32 %v930, %v1102
        %v1104 = vsub.f32 1.0, %v1103
        %v1105 = vmul.f32 %v1102, %v1104
        %v1106 = vadd.f32 %v1102, %v1105
        %vm1107 = vweird.f32 %v930
        %vm1108 = vweird.f32 %v1102
        %vm1109 = vmor %vm1107, %vm1108
        %v1110 = vsel %vm1109, %v1102, %v1106
        %v1111 = vand.u32 2147483647, %v930
        %vm1112 = vcmp.eq.f32.partialorder %v1111, 8.507059e+37
        %v1113 = vand.u32 %v930, 2147483648
        %v1114 = vor.u32 1.1754944e-38, %v1113
        %v1115 = vsel %vm1112, %v1114, %v1110
        %v1116 = vmul.f32 1.0, %v1115
        %v1117 = vrcp.pop %v931
        %v1118 = vmul.f32 %v931, %v1117
        %v1119 = vsub.f32 1.0, %v1118
        %v1120 = vmul.f32 %v1117, %v1119
        %v1121 = vadd.f32 %v1117, %v1120
        %vm1122 = vweird.f32 %v931
        %vm1123 = vweird.f32 %v1117
        %vm1124 = vmor %vm1122, %vm1123
        %v1125 = vsel %vm1124, %v1117, %v1121
        %v1126 = vand.u32 2147483647, %v931
        %vm1127 = vcmp.eq.f32.partialorder %v1126, 8.507059e+37
        %v1128 = vand.u32 %v931, 2147483648
        %v1129 = vor.u32 1.1754944e-38, %v1128
        %v1130 = vsel %vm1127, %v1129, %v1125
        %v1131 = vmul.f32 1.0, %v1130
        %v1132 = vrcp.pop %v932
        %v1133 = vmul.f32 %v932, %v1132
        %v1134 = vsub.f32 1.0, %v1133
        %v1135 = vmul.f32 %v1132, %v1134
        %v1136 = vadd.f32 %v1132, %v1135
        %vm1137 = vweird.f32 %v932
        %vm1138 = vweird.f32 %v1132
        %vm1139 = vmor %vm1137, %vm1138
        %v1140 = vsel %vm1139, %v1132, %v1136
        %v1141 = vand.u32 2147483647, %v932
        %vm1142 = vcmp.eq.f32.partialorder %v1141, 8.507059e+37
        %v1143 = vand.u32 %v932, 2147483648
        %v1144 = vor.u32 1.1754944e-38, %v1143
        %v1145 = vsel %vm1142, %v1144, %v1140
        %v1146 = vmul.f32 1.0, %v1145
        %v1147 = vrcp.pop %v933
        %v1148 = vmul.f32 %v933, %v1147
        %v1149 = vsub.f32 1.0, %v1148
        %v1150 = vmul.f32 %v1147, %v1149
        %v1151 = vadd.f32 %v1147, %v1150
        %vm1152 = vweird.f32 %v933
        %vm1153 = vweird.f32 %v1147
        %vm1154 = vmor %vm1152, %vm1153
        %v1155 = vsel %vm1154, %v1147, %v1151
        %v1156 = vand.u32 2147483647, %v933
        %vm1157 = vcmp.eq.f32.partialorder %v1156, 8.507059e+37
        %v1158 = vand.u32 %v933, 2147483648
        %v1159 = vor.u32 1.1754944e-38, %v1158
        %v1160 = vsel %vm1157, %v1159, %v1155
        %v1161 = vmul.f32 1.0, %v1160
        %v1162 = vrcp.pop %v934
        %v1163 = vmul.f32 %v934, %v1162
        %v1164 = vsub.f32 1.0, %v1163
        %v1165 = vmul.f32 %v1162, %v1164
        %v1166 = vadd.f32 %v1162, %v1165
        %vm1167 = vweird.f32 %v934
        %vm1168 = vweird.f32 %v1162
        %vm1169 = vmor %vm1167, %vm1168
        %v1170 = vsel %vm1169, %v1162, %v1166
        %v1171 = vand.u32 2147483647, %v934
        %vm1172 = vcmp.eq.f32.partialorder %v1171, 8.507059e+37
        %v1173 = vand.u32 %v934, 2147483648
        %v1174 = vor.u32 1.1754944e-38, %v1173
        %v1175 = vsel %vm1172, %v1174, %v1170
        %v1176 = vmul.f32 1.0, %v1175
        %v1177 = vrcp.pop %v935
        %v1178 = vmul.f32 %v935, %v1177
        %v1179 = vsub.f32 1.0, %v1178
        %v1180 = vmul.f32 %v1177, %v1179
        %v1181 = vadd.f32 %v1177, %v1180
        %vm1182 = vweird.f32 %v935
        %vm1183 = vweird.f32 %v1177
        %vm1184 = vmor %vm1182, %vm1183
        %v1185 = vsel %vm1184, %v1177, %v1181
        %v1186 = vand.u32 2147483647, %v935
        %vm1187 = vcmp.eq.f32.partialorder %v1186, 8.507059e+37
        %v1188 = vand.u32 %v935, 2147483648
        %v1189 = vor.u32 1.1754944e-38, %v1188
        %v1190 = vsel %vm1187, %v1189, %v1185
        %v1191 = vmul.f32 1.0, %v1190
        %v1192 = vrcp.pop %v936
        %v1193 = vmul.f32 %v936, %v1192
        %v1194 = vsub.f32 1.0, %v1193
        %v1195 = vmul.f32 %v1192, %v1194
        %v1196 = vadd.f32 %v1192, %v1195
        %vm1197 = vweird.f32 %v936
        %vm1198 = vweird.f32 %v1192
        %vm1199 = vmor %vm1197, %vm1198
        %v1200 = vsel %vm1199, %v1192, %v1196
        %v1201 = vand.u32 2147483647, %v936
        %vm1202 = vcmp.eq.f32.partialorder %v1201, 8.507059e+37
        %v1203 = vand.u32 %v936, 2147483648
        %v1204 = vor.u32 1.1754944e-38, %v1203
        %v1205 = vsel %vm1202, %v1204, %v1200
        %v1206 = vmul.f32 1.0, %v1205
        %v1207 = vrcp.pop %v937
        %v1208 = vmul.f32 %v937, %v1207
        %v1209 = vsub.f32 1.0, %v1208
        %v1210 = vmul.f32 %v1207, %v1209
        %v1211 = vadd.f32 %v1207, %v1210
        %vm1212 = vweird.f32 %v937
        %vm1213 = vweird.f32 %v1207
        %vm1214 = vmor %vm1212, %vm1213
        %v1215 = vsel %vm1214, %v1207, %v1211
        %v1216 = vand.u32 2147483647, %v937
        %vm1217 = vcmp.eq.f32.partialorder %v1216, 8.507059e+37
        %v1218 = vand.u32 %v937, 2147483648
        %v1219 = vor.u32 1.1754944e-38, %v1218
        %v1220 = vsel %vm1217, %v1219, %v1215
        %v1221 = vmul.f32 1.0, %v1220
        %v1222 = vrcp.pop %v938
        %v1223 = vmul.f32 %v938, %v1222
        %v1224 = vsub.f32 1.0, %v1223
        %v1225 = vmul.f32 %v1222, %v1224
        %v1226 = vadd.f32 %v1222, %v1225
        %vm1227 = vweird.f32 %v938
        %vm1228 = vweird.f32 %v1222
        %vm1229 = vmor %vm1227, %vm1228
        %v1230 = vsel %vm1229, %v1222, %v1226
        %v1231 = vand.u32 2147483647, %v938
        %vm1232 = vcmp.eq.f32.partialorder %v1231, 8.507059e+37
        %v1233 = vand.u32 %v938, 2147483648
        %v1234 = vor.u32 1.1754944e-38, %v1233
        %v1235 = vsel %vm1232, %v1234, %v1230
        %v1236 = vmul.f32 1.0, %v1235
        %v1237 = vrcp.pop %v939
        %v1238 = vmul.f32 %v939, %v1237
        %v1239 = vsub.f32 1.0, %v1238
        %v1240 = vmul.f32 %v1237, %v1239
        %v1241 = vadd.f32 %v1237, %v1240
        %vm1242 = vweird.f32 %v939
        %vm1243 = vweird.f32 %v1237
        %vm1244 = vmor %vm1242, %vm1243
        %v1245 = vsel %vm1244, %v1237, %v1241
        %v1246 = vand.u32 2147483647, %v939
        %vm1247 = vcmp.eq.f32.partialorder %v1246, 8.507059e+37
        %v1248 = vand.u32 %v939, 2147483648
        %v1249 = vor.u32 1.1754944e-38, %v1248
        %v1250 = vsel %vm1247, %v1249, %v1245
        %v1251 = vmul.f32 1.0, %v1250
        %v1252 = vrcp.pop %v940
        %v1253 = vmul.f32 %v940, %v1252
        %v1254 = vsub.f32 1.0, %v1253
        %v1255 = vmul.f32 %v1252, %v1254
        %v1256 = vadd.f32 %v1252, %v1255
        %vm1257 = vweird.f32 %v940
        %vm1258 = vweird.f32 %v1252
        %vm1259 = vmor %vm1257, %vm1258
        %v1260 = vsel %vm1259, %v1252, %v1256
        %v1261 = vand.u32 2147483647, %v940
        %vm1262 = vcmp.eq.f32.partialorder %v1261, 8.507059e+37
        %v1263 = vand.u32 %v940, 2147483648
        %v1264 = vor.u32 1.1754944e-38, %v1263
        %v1265 = vsel %vm1262, %v1264, %v1260
        %v1266 = vmul.f32 1.0, %v1265
        %v1267 = vrcp.pop %v941
        %v1268 = vmul.f32 %v941, %v1267
        %v1269 = vsub.f32 1.0, %v1268
        %v1270 = vmul.f32 %v1267, %v1269
        %v1271 = vadd.f32 %v1267, %v1270
        %vm1272 = vweird.f32 %v941
        %vm1273 = vweird.f32 %v1267
        %vm1274 = vmor %vm1272, %vm1273
        %v1275 = vsel %vm1274, %v1267, %v1271
        %v1276 = vand.u32 2147483647, %v941
        %vm1277 = vcmp.eq.f32.partialorder %v1276, 8.507059e+37
        %v1278 = vand.u32 %v941, 2147483648
        %v1279 = vor.u32 1.1754944e-38, %v1278
        %v1280 = vsel %vm1277, %v1279, %v1275
        %v1281 = vmul.f32 1.0, %v1280
        %v1282 = vrcp.pop %v942
        %v1283 = vmul.f32 %v942, %v1282
        %v1284 = vsub.f32 1.0, %v1283
        %v1285 = vmul.f32 %v1282, %v1284
        %v1286 = vadd.f32 %v1282, %v1285
        %vm1287 = vweird.f32 %v942
        %vm1288 = vweird.f32 %v1282
        %vm1289 = vmor %vm1287, %vm1288
        %v1290 = vsel %vm1289, %v1282, %v1286
        %v1291 = vand.u32 2147483647, %v942
        %vm1292 = vcmp.eq.f32.partialorder %v1291, 8.507059e+37
        %v1293 = vand.u32 %v942, 2147483648
        %v1294 = vor.u32 1.1754944e-38, %v1293
        %v1295 = vsel %vm1292, %v1294, %v1290
        %v1296 = vmul.f32 1.0, %v1295
        %v1297 = vrcp.pop %v943
        %v1298 = vmul.f32 %v943, %v1297
        %v1299 = vsub.f32 1.0, %v1298
        %v1300 = vmul.f32 %v1297, %v1299
        %v1301 = vadd.f32 %v1297, %v1300
        %vm1302 = vweird.f32 %v943
        %vm1303 = vweird.f32 %v1297
        %vm1304 = vmor %vm1302, %vm1303
        %v1305 = vsel %vm1304, %v1297, %v1301
        %v1306 = vand.u32 2147483647, %v943
        %vm1307 = vcmp.eq.f32.partialorder %v1306, 8.507059e+37
        %v1308 = vand.u32 %v943, 2147483648
        %v1309 = vor.u32 1.1754944e-38, %v1308
        %v1310 = vsel %vm1307, %v1309, %v1305
        %v1311 = vmul.f32 1.0, %v1310
        %v1312 = vrcp.pop %v944
        %v1313 = vmul.f32 %v944, %v1312
        %v1314 = vsub.f32 1.0, %v1313
        %v1315 = vmul.f32 %v1312, %v1314
        %v1316 = vadd.f32 %v1312, %v1315
        %vm1317 = vweird.f32 %v944
        %vm1318 = vweird.f32 %v1312
        %vm1319 = vmor %vm1317, %vm1318
        %v1320 = vsel %vm1319, %v1312, %v1316
        %v1321 = vand.u32 2147483647, %v944
        %vm1322 = vcmp.eq.f32.partialorder %v1321, 8.507059e+37
        %v1323 = vand.u32 %v944, 2147483648
        %v1324 = vor.u32 1.1754944e-38, %v1323
        %v1325 = vsel %vm1322, %v1324, %v1320
        %v1326 = vmul.f32 1.0, %v1325
        %v1327 = vrcp.pop %v945
        %v1328 = vmul.f32 %v945, %v1327
        %v1329 = vsub.f32 1.0, %v1328
        %v1330 = vmul.f32 %v1327, %v1329
        %v1331 = vadd.f32 %v1327, %v1330
        %vm1332 = vweird.f32 %v945
        %vm1333 = vweird.f32 %v1327
        %vm1334 = vmor %vm1332, %vm1333
        %v1335 = vsel %vm1334, %v1327, %v1331
        %v1336 = vand.u32 2147483647, %v945
        %vm1337 = vcmp.eq.f32.partialorder %v1336, 8.507059e+37
        %v1338 = vand.u32 %v945, 2147483648
        %v1339 = vor.u32 1.1754944e-38, %v1338
        %v1340 = vsel %vm1337, %v1339, %v1335
        %v1341 = vmul.f32 1.0, %v1340
        %v1342 = vrcp.pop %v946
        %v1343 = vmul.f32 %v946, %v1342
        %v1344 = vsub.f32 1.0, %v1343
        %v1345 = vmul.f32 %v1342, %v1344
        %v1346 = vadd.f32 %v1342, %v1345
        %vm1347 = vweird.f32 %v946
        %vm1348 = vweird.f32 %v1342
        %vm1349 = vmor %vm1347, %vm1348
        %v1350 = vsel %vm1349, %v1342, %v1346
        %v1351 = vand.u32 2147483647, %v946
        %vm1352 = vcmp.eq.f32.partialorder %v1351, 8.507059e+37
        %v1353 = vand.u32 %v946, 2147483648
        %v1354 = vor.u32 1.1754944e-38, %v1353
        %v1355 = vsel %vm1352, %v1354, %v1350
        %v1356 = vmul.f32 1.0, %v1355
        %v1357 = vrcp.pop %v947
        %v1358 = vmul.f32 %v947, %v1357
        %v1359 = vsub.f32 1.0, %v1358
        %v1360 = vmul.f32 %v1357, %v1359
        %v1361 = vadd.f32 %v1357, %v1360
        %vm1362 = vweird.f32 %v947
        %vm1363 = vweird.f32 %v1357
        %vm1364 = vmor %vm1362, %vm1363
        %v1365 = vsel %vm1364, %v1357, %v1361
        %v1366 = vand.u32 2147483647, %v947
        %vm1367 = vcmp.eq.f32.partialorder %v1366, 8.507059e+37
        %v1368 = vand.u32 %v947, 2147483648
        %v1369 = vor.u32 1.1754944e-38, %v1368
        %v1370 = vsel %vm1367, %v1369, %v1365
        %v1371 = vmul.f32 1.0, %v1370
        %v1372 = vrcp.pop %v948
        %v1373 = vmul.f32 %v948, %v1372
        %v1374 = vsub.f32 1.0, %v1373
        %v1375 = vmul.f32 %v1372, %v1374
        %v1376 = vadd.f32 %v1372, %v1375
        %vm1377 = vweird.f32 %v948
        %vm1378 = vweird.f32 %v1372
        %vm1379 = vmor %vm1377, %vm1378
        %v1380 = vsel %vm1379, %v1372, %v1376
        %v1381 = vand.u32 2147483647, %v948
        %vm1382 = vcmp.eq.f32.partialorder %v1381, 8.507059e+37
        %v1383 = vand.u32 %v948, 2147483648
        %v1384 = vor.u32 1.1754944e-38, %v1383
        %v1385 = vsel %vm1382, %v1384, %v1380
        %v1386 = vmul.f32 1.0, %v1385
        %v1387 = vrcp.pop %v949
        %v1388 = vmul.f32 %v949, %v1387
        %v1389 = vsub.f32 1.0, %v1388
        %v1390 = vmul.f32 %v1387, %v1389
        %v1391 = vadd.f32 %v1387, %v1390
        %vm1392 = vweird.f32 %v949
        %vm1393 = vweird.f32 %v1387
        %vm1394 = vmor %vm1392, %vm1393
        %v1395 = vsel %vm1394, %v1387, %v1391
        %v1396 = vand.u32 2147483647, %v949
        %vm1397 = vcmp.eq.f32.partialorder %v1396, 8.507059e+37
        %v1398 = vand.u32 %v949, 2147483648
        %v1399 = vor.u32 1.1754944e-38, %v1398
        %v1400 = vsel %vm1397, %v1399, %v1395
        %v1401 = vmul.f32 1.0, %v1400
        %v1402 = vrcp.pop %v950
        %v1403 = vmul.f32 %v950, %v1402
        %v1404 = vsub.f32 1.0, %v1403
        %v1405 = vmul.f32 %v1402, %v1404
        %v1406 = vadd.f32 %v1402, %v1405
        %vm1407 = vweird.f32 %v950
        %vm1408 = vweird.f32 %v1402
        %vm1409 = vmor %vm1407, %vm1408
        %v1410 = vsel %vm1409, %v1402, %v1406
        %v1411 = vand.u32 2147483647, %v950
        %vm1412 = vcmp.eq.f32.partialorder %v1411, 8.507059e+37
        %v1413 = vand.u32 %v950, 2147483648
        %v1414 = vor.u32 1.1754944e-38, %v1413
        %v1415 = vsel %vm1412, %v1414, %v1410
        %v1416 = vmul.f32 1.0, %v1415
        %v1417 = vrcp.pop %v951
        %v1418 = vmul.f32 %v951, %v1417
        %v1419 = vsub.f32 1.0, %v1418
        %v1420 = vmul.f32 %v1417, %v1419
        %v1421 = vadd.f32 %v1417, %v1420
        %vm1422 = vweird.f32 %v951
        %vm1423 = vweird.f32 %v1417
        %vm1424 = vmor %vm1422, %vm1423
        %v1425 = vsel %vm1424, %v1417, %v1421
        %v1426 = vand.u32 2147483647, %v951
        %vm1427 = vcmp.eq.f32.partialorder %v1426, 8.507059e+37
        %v1428 = vand.u32 %v951, 2147483648
        %v1429 = vor.u32 1.1754944e-38, %v1428
        %v1430 = vsel %vm1427, %v1429, %v1425
        %v1431 = vmul.f32 1.0, %v1430
        %v1432 = vmul.f32 %v966, 1.0614054
        %v1433 = vmul.f32 %v981, 1.0614054
        %v1434 = vmul.f32 %v996, 1.0614054
        %v1435 = vmul.f32 %v1011, 1.0614054
        %v1436 = vmul.f32 %v1026, 1.0614054
        %v1437 = vmul.f32 %v1041, 1.0614054
        %v1438 = vmul.f32 %v1056, 1.0614054
        %v1439 = vmul.f32 %v1071, 1.0614054
        %v1440 = vmul.f32 %v1086, 1.0614054
        %v1441 = vmul.f32 %v1101, 1.0614054
        %v1442 = vmul.f32 %v1116, 1.0614054
        %v1443 = vmul.f32 %v1131, 1.0614054
        %v1444 = vmul.f32 %v1146, 1.0614054
        %v1445 = vmul.f32 %v1161, 1.0614054
        %v1446 = vmul.f32 %v1176, 1.0614054
        %v1447 = vmul.f32 %v1191, 1.0614054
        %v1448 = vmul.f32 %v1206, 1.0614054
        %v1449 = vmul.f32 %v1221, 1.0614054
        %v1450 = vmul.f32 %v1236, 1.0614054
        %v1451 = vmul.f32 %v1251, 1.0614054
        %v1452 = vmul.f32 %v1266, 1.0614054
        %v1453 = vmul.f32 %v1281, 1.0614054
        %v1454 = vmul.f32 %v1296, 1.0614054
        %v1455 = vmul.f32 %v1311, 1.0614054
        %v1456 = vmul.f32 %v1326, 1.0614054
        %v1457 = vmul.f32 %v1341, 1.0614054
        %v1458 = vmul.f32 %v1356, 1.0614054
        %v1459 = vmul.f32 %v1371, 1.0614054
        %v1460 = vmul.f32 %v1386, 1.0614054
        %v1461 = vmul.f32 %v1401, 1.0614054
        %v1462 = vmul.f32 %v1416, 1.0614054
        %v1463 = vmul.f32 %v1431, 1.0614054
        %v1464 = vadd.f32 %v1432, -1.4531521
        %v1465 = vadd.f32 %v1433, -1.4531521
        %v1466 = vadd.f32 %v1434, -1.4531521
        %v1467 = vadd.f32 %v1435, -1.4531521
        %v1468 = vadd.f32 %v1436, -1.4531521
        %v1469 = vadd.f32 %v1437, -1.4531521
        %v1470 = vadd.f32 %v1438, -1.4531521
        %v1471 = vadd.f32 %v1439, -1.4531521
        %v1472 = vadd.f32 %v1440, -1.4531521
        %v1473 = vadd.f32 %v1441, -1.4531521
        %v1474 = vadd.f32 %v1442, -1.4531521
        %v1475 = vadd.f32 %v1443, -1.4531521
        %v1476 = vadd.f32 %v1444, -1.4531521
        %v1477 = vadd.f32 %v1445, -1.4531521
        %v1478 = vadd.f32 %v1446, -1.4531521
        %v1479 = vadd.f32 %v1447, -1.4531521
        %v1480 = vadd.f32 %v1448, -1.4531521
        %v1481 = vadd.f32 %v1449, -1.4531521
        %v1482 = vadd.f32 %v1450, -1.4531521
        %v1483 = vadd.f32 %v1451, -1.4531521
        %v1484 = vadd.f32 %v1452, -1.4531521
        %v1485 = vadd.f32 %v1453, -1.4531521
        %v1486 = vadd.f32 %v1454, -1.4531521
        %v1487 = vadd.f32 %v1455, -1.4531521
        %v1488 = vadd.f32 %v1456, -1.4531521
        %v1489 = vadd.f32 %v1457, -1.4531521
        %v1490 = vadd.f32 %v1458, -1.4531521
        %v1491 = vadd.f32 %v1459, -1.4531521
        %v1492 = vadd.f32 %v1460, -1.4531521
        %v1493 = vadd.f32 %v1461, -1.4531521
        %v1494 = vadd.f32 %v1462, -1.4531521
        %v1495 = vadd.f32 %v1463, -1.4531521
        %v1496 = vmul.f32 %v966, %v1464
        %v1497 = vmul.f32 %v981, %v1465
        %v1498 = vmul.f32 %v996, %v1466
        %v1499 = vmul.f32 %v1011, %v1467
        %v1500 = vmul.f32 %v1026, %v1468
        %v1501 = vmul.f32 %v1041, %v1469
        %v1502 = vmul.f32 %v1056, %v1470
        %v1503 = vmul.f32 %v1071, %v1471
        %v1504 = vmul.f32 %v1086, %v1472
        %v1505 = vmul.f32 %v1101, %v1473
        %v1506 = vmul.f32 %v1116, %v1474
        %v1507 = vmul.f32 %v1131, %v1475
        %v1508 = vmul.f32 %v1146, %v1476
        %v1509 = vmul.f32 %v1161, %v1477
        %v1510 = vmul.f32 %v1176, %v1478
        %v1511 = vmul.f32 %v1191, %v1479
        %v1512 = vmul.f32 %v1206, %v1480
        %v1513 = vmul.f32 %v1221, %v1481
        %v1514 = vmul.f32 %v1236, %v1482
        %v1515 = vmul.f32 %v1251, %v1483
        %v1516 = vmul.f32 %v1266, %v1484
        %v1517 = vmul.f32 %v1281, %v1485
        %v1518 = vmul.f32 %v1296, %v1486
        %v1519 = vmul.f32 %v1311, %v1487
        %v1520 = vmul.f32 %v1326, %v1488
        %v1521 = vmul.f32 %v1341, %v1489
        %v1522 = vmul.f32 %v1356, %v1490
        %v1523 = vmul.f32 %v1371, %v1491
        %v1524 = vmul.f32 %v1386, %v1492
        %v1525 = vmul.f32 %v1401, %v1493
        %v1526 = vmul.f32 %v1416, %v1494
        %v1527 = vmul.f32 %v1431, %v1495
        %v1528 = vadd.f32 %v1496, 1.4214138
        %v1529 = vadd.f32 %v1497, 1.4214138
        %v1530 = vadd.f32 %v1498, 1.4214138
        %v1531 = vadd.f32 %v1499, 1.4214138
        %v1532 = vadd.f32 %v1500, 1.4214138
        %v1533 = vadd.f32 %v1501, 1.4214138
        %v1534 = vadd.f32 %v1502, 1.4214138
        %v1535 = vadd.f32 %v1503, 1.4214138
        %v1536 = vadd.f32 %v1504, 1.4214138
        %v1537 = vadd.f32 %v1505, 1.4214138
        %v1538 = vadd.f32 %v1506, 1.4214138
        %v1539 = vadd.f32 %v1507, 1.4214138
        %v1540 = vadd.f32 %v1508, 1.4214138
        %v1541 = vadd.f32 %v1509, 1.4214138
        %v1542 = vadd.f32 %v1510, 1.4214138
        %v1543 = vadd.f32 %v1511, 1.4214138
        %v1544 = vadd.f32 %v1512, 1.4214138
        %v1545 = vadd.f32 %v1513, 1.4214138
        %v1546 = vadd.f32 %v1514, 1.4214138
        %v1547 = vadd.f32 %v1515, 1.4214138
        %v1548 = vadd.f32 %v1516, 1.4214138
        %v1549 = vadd.f32 %v1517, 1.4214138
        %v1550 = vadd.f32 %v1518, 1.4214138
        %v1551 = vadd.f32 %v1519, 1.4214138
        %v1552 = vadd.f32 %v1520, 1.4214138
        %v1553 = vadd.f32 %v1521, 1.4214138
        %v1554 = vadd.f32 %v1522, 1.4214138
        %v1555 = vadd.f32 %v1523, 1.4214138
        %v1556 = vadd.f32 %v1524, 1.4214138
        %v1557 = vadd.f32 %v1525, 1.4214138
        %v1558 = vadd.f32 %v1526, 1.4214138
        %v1559 = vadd.f32 %v1527, 1.4214138
        %v1560 = vmul.f32 %v966, %v1528
        %v1561 = vmul.f32 %v981, %v1529
        %v1562 = vmul.f32 %v996, %v1530
        %v1563 = vmul.f32 %v1011, %v1531
        %v1564 = vmul.f32 %v1026, %v1532
        %v1565 = vmul.f32 %v1041, %v1533
        %v1566 = vmul.f32 %v1056, %v1534
        %v1567 = vmul.f32 %v1071, %v1535
        %v1568 = vmul.f32 %v1086, %v1536
        %v1569 = vmul.f32 %v1101, %v1537
        %v1570 = vmul.f32 %v1116, %v1538
        %v1571 = vmul.f32 %v1131, %v1539
        %v1572 = vmul.f32 %v1146, %v1540
        %v1573 = vmul.f32 %v1161, %v1541
        %v1574 = vmul.f32 %v1176, %v1542
        %v1575 = vmul.f32 %v1191, %v1543
        %v1576 = vmul.f32 %v1206, %v1544
        %v1577 = vmul.f32 %v1221, %v1545
        %v1578 = vmul.f32 %v1236, %v1546
        %v1579 = vmul.f32 %v1251, %v1547
        %v1580 = vmul.f32 %v1266, %v1548
        %v1581 = vmul.f32 %v1281, %v1549
        %v1582 = vmul.f32 %v1296, %v1550
        %v1583 = vmul.f32 %v1311, %v1551
        %v1584 = vmul.f32 %v1326, %v1552
        %v1585 = vmul.f32 %v1341, %v1553
        %v1586 = vmul.f32 %v1356, %v1554
        %v1587 = vmul.f32 %v1371, %v1555
        %v1588 = vmul.f32 %v1386, %v1556
        %v1589 = vmul.f32 %v1401, %v1557
        %v1590 = vmul.f32 %v1416, %v1558
        %v1591 = vmul.f32 %v1431, %v1559
        %v1592 = vadd.f32 %v1560, -0.28449672
        %v1593 = vadd.f32 %v1561, -0.28449672
        %v1594 = vadd.f32 %v1562, -0.28449672
        %v1595 = vadd.f32 %v1563, -0.28449672
        %v1596 = vadd.f32 %v1564, -0.28449672
        %v1597 = vadd.f32 %v1565, -0.28449672
        %v1598 = vadd.f32 %v1566, -0.28449672
        %v1599 = vadd.f32 %v1567, -0.28449672
        %v1600 = vadd.f32 %v1568, -0.28449672
        %v1601 = vadd.f32 %v1569, -0.28449672
        %v1602 = vadd.f32 %v1570, -0.28449672
        %v1603 = vadd.f32 %v1571, -0.28449672
        %v1604 = vadd.f32 %v1572, -0.28449672
        %v1605 = vadd.f32 %v1573, -0.28449672
        %v1606 = vadd.f32 %v1574, -0.28449672
        %v1607 = vadd.f32 %v1575, -0.28449672
        %v1608 = vadd.f32 %v1576, -0.28449672
        %v1609 = vadd.f32 %v1577, -0.28449672
        %v1610 = vadd.f32 %v1578, -0.28449672
        %v1611 = vadd.f32 %v1579, -0.28449672
        %v1612 = vadd.f32 %v1580, -0.28449672
        %v1613 = vadd.f32 %v1581, -0.28449672
        %v1614 = vadd.f32 %v1582, -0.28449672
        %v1615 = vadd.f32 %v1583, -0.28449672
        %v1616 = vadd.f32 %v1584, -0.28449672
        %v1617 = vadd.f32 %v1585, -0.28449672
        %v1618 = vadd.f32 %v1586, -0.28449672
        %v1619 = vadd.f32 %v1587, -0.28449672
        %v1620 = vadd.f32 %v1588, -0.28449672
        %v1621 = vadd.f32 %v1589, -0.28449672
        %v1622 = vadd.f32 %v1590, -0.28449672
        %v1623 = vadd.f32 %v1591, -0.28449672
        %v1624 = vmul.f32 %v966, %v1592
        %v1625 = vmul.f32 %v981, %v1593
        %v1626 = vmul.f32 %v996, %v1594
        %v1627 = vmul.f32 %v1011, %v1595
        %v1628 = vmul.f32 %v1026, %v1596
        %v1629 = vmul.f32 %v1041, %v1597
        %v1630 = vmul.f32 %v1056, %v1598
        %v1631 = vmul.f32 %v1071, %v1599
        %v1632 = vmul.f32 %v1086, %v1600
        %v1633 = vmul.f32 %v1101, %v1601
        %v1634 = vmul.f32 %v1116, %v1602
        %v1635 = vmul.f32 %v1131, %v1603
        %v1636 = vmul.f32 %v1146, %v1604
        %v1637 = vmul.f32 %v1161, %v1605
        %v1638 = vmul.f32 %v1176, %v1606
        %v1639 = vmul.f32 %v1191, %v1607
        %v1640 = vmul.f32 %v1206, %v1608
        %v1641 = vmul.f32 %v1221, %v1609
        %v1642 = vmul.f32 %v1236, %v1610
        %v1643 = vmul.f32 %v1251, %v1611
        %v1644 = vmul.f32 %v1266, %v1612
        %v1645 = vmul.f32 %v1281, %v1613
        %v1646 = vmul.f32 %v1296, %v1614
        %v1647 = vmul.f32 %v1311, %v1615
        %v1648 = vmul.f32 %v1326, %v1616
        %v1649 = vmul.f32 %v1341, %v1617
        %v1650 = vmul.f32 %v1356, %v1618
        %v1651 = vmul.f32 %v1371, %v1619
        %v1652 = vmul.f32 %v1386, %v1620
        %v1653 = vmul.f32 %v1401, %v1621
        %v1654 = vmul.f32 %v1416, %v1622
        %v1655 = vmul.f32 %v1431, %v1623
        %v1656 = vadd.f32 %v1624, 0.2548296
        %v1657 = vadd.f32 %v1625, 0.2548296
        %v1658 = vadd.f32 %v1626, 0.2548296
        %v1659 = vadd.f32 %v1627, 0.2548296
        %v1660 = vadd.f32 %v1628, 0.2548296
        %v1661 = vadd.f32 %v1629, 0.2548296
        %v1662 = vadd.f32 %v1630, 0.2548296
        %v1663 = vadd.f32 %v1631, 0.2548296
        %v1664 = vadd.f32 %v1632, 0.2548296
        %v1665 = vadd.f32 %v1633, 0.2548296
        %v1666 = vadd.f32 %v1634, 0.2548296
        %v1667 = vadd.f32 %v1635, 0.2548296
        %v1668 = vadd.f32 %v1636, 0.2548296
        %v1669 = vadd.f32 %v1637, 0.2548296
        %v1670 = vadd.f32 %v1638, 0.2548296
        %v1671 = vadd.f32 %v1639, 0.2548296
        %v1672 = vadd.f32 %v1640, 0.2548296
        %v1673 = vadd.f32 %v1641, 0.2548296
        %v1674 = vadd.f32 %v1642, 0.2548296
        %v1675 = vadd.f32 %v1643, 0.2548296
        %v1676 = vadd.f32 %v1644, 0.2548296
        %v1677 = vadd.f32 %v1645, 0.2548296
        %v1678 = vadd.f32 %v1646, 0.2548296
        %v1679 = vadd.f32 %v1647, 0.2548296
        %v1680 = vadd.f32 %v1648, 0.2548296
        %v1681 = vadd.f32 %v1649, 0.2548296
        %v1682 = vadd.f32 %v1650, 0.2548296
        %v1683 = vadd.f32 %v1651, 0.2548296
        %v1684 = vadd.f32 %v1652, 0.2548296
        %v1685 = vadd.f32 %v1653, 0.2548296
        %v1686 = vadd.f32 %v1654, 0.2548296
        %v1687 = vadd.f32 %v1655, 0.2548296
        %v1688 = vmul.f32 %v966, %v1656
        %v1689 = vmul.f32 %v981, %v1657
        %v1690 = vmul.f32 %v996, %v1658
        %v1691 = vmul.f32 %v1011, %v1659
        %v1692 = vmul.f32 %v1026, %v1660
        %v1693 = vmul.f32 %v1041, %v1661
        %v1694 = vmul.f32 %v1056, %v1662
        %v1695 = vmul.f32 %v1071, %v1663
        %v1696 = vmul.f32 %v1086, %v1664
        %v1697 = vmul.f32 %v1101, %v1665
        %v1698 = vmul.f32 %v1116, %v1666
        %v1699 = vmul.f32 %v1131, %v1667
        %v1700 = vmul.f32 %v1146, %v1668
        %v1701 = vmul.f32 %v1161, %v1669
        %v1702 = vmul.f32 %v1176, %v1670
        %v1703 = vmul.f32 %v1191, %v1671
        %v1704 = vmul.f32 %v1206, %v1672
        %v1705 = vmul.f32 %v1221, %v1673
        %v1706 = vmul.f32 %v1236, %v1674
        %v1707 = vmul.f32 %v1251, %v1675
        %v1708 = vmul.f32 %v1266, %v1676
        %v1709 = vmul.f32 %v1281, %v1677
        %v1710 = vmul.f32 %v1296, %v1678
        %v1711 = vmul.f32 %v1311, %v1679
        %v1712 = vmul.f32 %v1326, %v1680
        %v1713 = vmul.f32 %v1341, %v1681
        %v1714 = vmul.f32 %v1356, %v1682
        %v1715 = vmul.f32 %v1371, %v1683
        %v1716 = vmul.f32 %v1386, %v1684
        %v1717 = vmul.f32 %v1401, %v1685
        %v1718 = vmul.f32 %v1416, %v1686
        %v1719 = vmul.f32 %v1431, %v1687
        %v1720 = vsub.f32 0.0, %v856
        %v1721 = vsub.f32 0.0, %v857
        %v1722 = vsub.f32 0.0, %v858
        %v1723 = vsub.f32 0.0, %v859
        %v1724 = vsub.f32 0.0, %v860
        %v1725 = vsub.f32 0.0, %v861
        %v1726 = vsub.f32 0.0, %v862
        %v1727 = vsub.f32 0.0, %v863
        %v1728 = vsub.f32 0.0, %v864
        %v1729 = vsub.f32 0.0, %v865
        %v1730 = vsub.f32 0.0, %v866
        %v1731 = vsub.f32 0.0, %v867
        %v1732 = vsub.f32 0.0, %v868
        %v1733 = vsub.f32 0.0, %v869
        %v1734 = vsub.f32 0.0, %v870
        %v1735 = vsub.f32 0.0, %v871
        %v1736 = vsub.f32 0.0, %v872
        %v1737 = vsub.f32 0.0, %v873
        %v1738 = vsub.f32 0.0, %v874
        %v1739 = vsub.f32 0.0, %v875
        %v1740 = vsub.f32 0.0, %v876
        %v1741 = vsub.f32 0.0, %v877
        %v1742 = vsub.f32 0.0, %v878
        %v1743 = vsub.f32 0.0, %v879
        %v1744 = vsub.f32 0.0, %v880
        %v1745 = vsub.f32 0.0, %v881
        %v1746 = vsub.f32 0.0, %v882
        %v1747 = vsub.f32 0.0, %v883
        %v1748 = vsub.f32 0.0, %v884
        %v1749 = vsub.f32 0.0, %v885
        %v1750 = vsub.f32 0.0, %v886
        %v1751 = vsub.f32 0.0, %v887
        %v1752 = vmul.f32 %v1720, %v856
        %v1753 = vmul.f32 %v1721, %v857
        %v1754 = vmul.f32 %v1722, %v858
        %v1755 = vmul.f32 %v1723, %v859
        %v1756 = vmul.f32 %v1724, %v860
        %v1757 = vmul.f32 %v1725, %v861
        %v1758 = vmul.f32 %v1726, %v862
        %v1759 = vmul.f32 %v1727, %v863
        %v1760 = vmul.f32 %v1728, %v864
        %v1761 = vmul.f32 %v1729, %v865
        %v1762 = vmul.f32 %v1730, %v866
        %v1763 = vmul.f32 %v1731, %v867
        %v1764 = vmul.f32 %v1732, %v868
        %v1765 = vmul.f32 %v1733, %v869
        %v1766 = vmul.f32 %v1734, %v870
        %v1767 = vmul.f32 %v1735, %v871
        %v1768 = vmul.f32 %v1736, %v872
        %v1769 = vmul.f32 %v1737, %v873
        %v1770 = vmul.f32 %v1738, %v874
        %v1771 = vmul.f32 %v1739, %v875
        %v1772 = vmul.f32 %v1740, %v876
        %v1773 = vmul.f32 %v1741, %v877
        %v1774 = vmul.f32 %v1742, %v878
        %v1775 = vmul.f32 %v1743, %v879
        %v1776 = vmul.f32 %v1744, %v880
        %v1777 = vmul.f32 %v1745, %v881
        %v1778 = vmul.f32 %v1746, %v882
        %v1779 = vmul.f32 %v1747, %v883
        %v1780 = vmul.f32 %v1748, %v884
        %v1781 = vmul.f32 %v1749, %v885
        %v1782 = vmul.f32 %v1750, %v886
        %v1783 = vmul.f32 %v1751, %v887
        %v1784 = vmul.f32 %v1752, 1.442695
        %v1785 = vpow.pop %v1784
        %v1786 = vmul.f32 %v1753, 1.442695
        %v1787 = vpow.pop %v1786
        %v1788 = vmul.f32 %v1754, 1.442695
        %v1789 = vpow.pop %v1788
        %v1790 = vmul.f32 %v1755, 1.442695
        %v1791 = vpow.pop %v1790
        %v1792 = vmul.f32 %v1756, 1.442695
        %v1793 = vpow.pop %v1792
        %v1794 = vmul.f32 %v1757, 1.442695
        %v1795 = vpow.pop %v1794
        %v1796 = vmul.f32 %v1758, 1.442695
        %v1797 = vpow.pop %v1796
        %v1798 = vmul.f32 %v1759, 1.442695
        %v1799 = vpow.pop %v1798
        %v1800 = vmul.f32 %v1760, 1.442695
        %v1801 = vpow.pop %v1800
        %v1802 = vmul.f32 %v1761, 1.442695
        %v1803 = vpow.pop %v1802
        %v1804 = vmul.f32 %v1762, 1.442695
        %v1805 = vpow.pop %v1804
        %v1806 = vmul.f32 %v1763, 1.442695
        %v1807 = vpow.pop %v1806
        %v1808 = vmul.f32 %v1764, 1.442695
        %v1809 = vpow.pop %v1808
        %v1810 = vmul.f32 %v1765, 1.442695
        %v1811 = vpow.pop %v1810
        %v1812 = vmul.f32 %v1766, 1.442695
        %v1813 = vpow.pop %v1812
        %v1814 = vmul.f32 %v1767, 1.442695
        %v1815 = vpow.pop %v1814
        %v1816 = vmul.f32 %v1768, 1.442695
        %v1817 = vpow.pop %v1816
        %v1818 = vmul.f32 %v1769, 1.442695
        %v1819 = vpow.pop %v1818
        %v1820 = vmul.f32 %v1770, 1.442695
        %v1821 = vpow.pop %v1820
        %v1822 = vmul.f32 %v1771, 1.442695
        %v1823 = vpow.pop %v1822
        %v1824 = vmul.f32 %v1772, 1.442695
        %v1825 = vpow.pop %v1824
        %v1826 = vmul.f32 %v1773, 1.442695
        %v1827 = vpow.pop %v1826
        %v1828 = vmul.f32 %v1774, 1.442695
        %v1829 = vpow.pop %v1828
        %v1830 = vmul.f32 %v1775, 1.442695
        %v1831 = vpow.pop %v1830
        %v1832 = vmul.f32 %v1776, 1.442695
        %v1833 = vpow.pop %v1832
        %v1834 = vmul.f32 %v1777, 1.442695
        %v1835 = vpow.pop %v1834
        %v1836 = vmul.f32 %v1778, 1.442695
        %v1837 = vpow.pop %v1836
        %v1838 = vmul.f32 %v1779, 1.442695
        %v1839 = vpow.pop %v1838
        %v1840 = vmul.f32 %v1780, 1.442695
        %v1841 = vpow.pop %v1840
        %v1842 = vmul.f32 %v1781, 1.442695
        %v1843 = vpow.pop %v1842
        %v1844 = vmul.f32 %v1782, 1.442695
        %v1845 = vpow.pop %v1844
        %v1846 = vmul.f32 %v1783, 1.442695
        %v1847 = vpow.pop %v1846
        %v1848 = vmul.f32 %v1688, %v1785
        %v1849 = vmul.f32 %v1689, %v1787
        %v1850 = vmul.f32 %v1690, %v1789
        %v1851 = vmul.f32 %v1691, %v1791
        %v1852 = vmul.f32 %v1692, %v1793
        %v1853 = vmul.f32 %v1693, %v1795
        %v1854 = vmul.f32 %v1694, %v1797
        %v1855 = vmul.f32 %v1695, %v1799
        %v1856 = vmul.f32 %v1696, %v1801
        %v1857 = vmul.f32 %v1697, %v1803
        %v1858 = vmul.f32 %v1698, %v1805
        %v1859 = vmul.f32 %v1699, %v1807
        %v1860 = vmul.f32 %v1700, %v1809
        %v1861 = vmul.f32 %v1701, %v1811
        %v1862 = vmul.f32 %v1702, %v1813
        %v1863 = vmul.f32 %v1703, %v1815
        %v1864 = vmul.f32 %v1704, %v1817
        %v1865 = vmul.f32 %v1705, %v1819
        %v1866 = vmul.f32 %v1706, %v1821
        %v1867 = vmul.f32 %v1707, %v1823
        %v1868 = vmul.f32 %v1708, %v1825
        %v1869 = vmul.f32 %v1709, %v1827
        %v1870 = vmul.f32 %v1710, %v1829
        %v1871 = vmul.f32 %v1711, %v1831
        %v1872 = vmul.f32 %v1712, %v1833
        %v1873 = vmul.f32 %v1713, %v1835
        %v1874 = vmul.f32 %v1714, %v1837
        %v1875 = vmul.f32 %v1715, %v1839
        %v1876 = vmul.f32 %v1716, %v1841
        %v1877 = vmul.f32 %v1717, %v1843
        %v1878 = vmul.f32 %v1718, %v1845
        %v1879 = vmul.f32 %v1719, %v1847
        %v1880 = vsub.f32 1.0, %v1848
        %v1881 = vsub.f32 1.0, %v1849
        %v1882 = vsub.f32 1.0, %v1850
        %v1883 = vsub.f32 1.0, %v1851
        %v1884 = vsub.f32 1.0, %v1852
        %v1885 = vsub.f32 1.0, %v1853
        %v1886 = vsub.f32 1.0, %v1854
        %v1887 = vsub.f32 1.0, %v1855
        %v1888 = vsub.f32 1.0, %v1856
        %v1889 = vsub.f32 1.0, %v1857
        %v1890 = vsub.f32 1.0, %v1858
        %v1891 = vsub.f32 1.0, %v1859
        %v1892 = vsub.f32 1.0, %v1860
        %v1893 = vsub.f32 1.0, %v1861
        %v1894 = vsub.f32 1.0, %v1862
        %v1895 = vsub.f32 1.0, %v1863
        %v1896 = vsub.f32 1.0, %v1864
        %v1897 = vsub.f32 1.0, %v1865
        %v1898 = vsub.f32 1.0, %v1866
        %v1899 = vsub.f32 1.0, %v1867
        %v1900 = vsub.f32 1.0, %v1868
        %v1901 = vsub.f32 1.0, %v1869
        %v1902 = vsub.f32 1.0, %v1870
        %v1903 = vsub.f32 1.0, %v1871
        %v1904 = vsub.f32 1.0, %v1872
        %v1905 = vsub.f32 1.0, %v1873
        %v1906 = vsub.f32 1.0, %v1874
        %v1907 = vsub.f32 1.0, %v1875
        %v1908 = vsub.f32 1.0, %v1876
        %v1909 = vsub.f32 1.0, %v1877
        %v1910 = vsub.f32 1.0, %v1878
        %v1911 = vsub.f32 1.0, %v1879
        %vm1912 = vcmp.lt.f32.partialorder %v824, 0.0
        %vm1913 = vcmp.lt.f32.partialorder %v825, 0.0
        %vm1914 = vcmp.lt.f32.partialorder %v826, 0.0
        %vm1915 = vcmp.lt.f32.partialorder %v827, 0.0
        %vm1916 = vcmp.lt.f32.partialorder %v828, 0.0
        %vm1917 = vcmp.lt.f32.partialorder %v829, 0.0
        %vm1918 = vcmp.lt.f32.partialorder %v830, 0.0
        %vm1919 = vcmp.lt.f32.partialorder %v831, 0.0
        %vm1920 = vcmp.lt.f32.partialorder %v832, 0.0
        %vm1921 = vcmp.lt.f32.partialorder %v833, 0.0
        %vm1922 = vcmp.lt.f32.partialorder %v834, 0.0
        %vm1923 = vcmp.lt.f32.partialorder %v835, 0.0
        %vm1924 = vcmp.lt.f32.partialorder %v836, 0.0
        %vm1925 = vcmp.lt.f32.partialorder %v837, 0.0
        %vm1926 = vcmp.lt.f32.partialorder %v838, 0.0
        %vm1927 = vcmp.lt.f32.partialorder %v839, 0.0
        %vm1928 = vcmp.lt.f32.partialorder %v840, 0.0
        %vm1929 = vcmp.lt.f32.partialorder %v841, 0.0
        %vm1930 = vcmp.lt.f32.partialorder %v842, 0.0
        %vm1931 = vcmp.lt.f32.partialorder %v843, 0.0
        %vm1932 = vcmp.lt.f32.partialorder %v844, 0.0
        %vm1933 = vcmp.lt.f32.partialorder %v845, 0.0
        %vm1934 = vcmp.lt.f32.partialorder %v846, 0.0
        %vm1935 = vcmp.lt.f32.partialorder %v847, 0.0
        %vm1936 = vcmp.lt.f32.partialorder %v848, 0.0
        %vm1937 = vcmp.lt.f32.partialorder %v849, 0.0
        %vm1938 = vcmp.lt.f32.partialorder %v850, 0.0
        %vm1939 = vcmp.lt.f32.partialorder %v851, 0.0
        %vm1940 = vcmp.lt.f32.partialorder %v852, 0.0
        %vm1941 = vcmp.lt.f32.partialorder %v853, 0.0
        %vm1942 = vcmp.lt.f32.partialorder %v854, 0.0
        %vm1943 = vcmp.lt.f32.partialorder %v855, 0.0
        %v1944 = vsub.f32 0.0, %v1880
        %v1945 = vsub.f32 0.0, %v1881
        %v1946 = vsub.f32 0.0, %v1882
        %v1947 = vsub.f32 0.0, %v1883
        %v1948 = vsub.f32 0.0, %v1884
        %v1949 = vsub.f32 0.0, %v1885
        %v1950 = vsub.f32 0.0, %v1886
        %v1951 = vsub.f32 0.0, %v1887
        %v1952 = vsub.f32 0.0, %v1888
        %v1953 = vsub.f32 0.0, %v1889
        %v1954 = vsub.f32 0.0, %v1890
        %v1955 = vsub.f32 0.0, %v1891
        %v1956 = vsub.f32 0.0, %v1892
        %v1957 = vsub.f32 0.0, %v1893
        %v1958 = vsub.f32 0.0, %v1894
        %v1959 = vsub.f32 0.0, %v1895
        %v1960 = vsub.f32 0.0, %v1896
        %v1961 = vsub.f32 0.0, %v1897
        %v1962 = vsub.f32 0.0, %v1898
        %v1963 = vsub.f32 0.0, %v1899
        %v1964 = vsub.f32 0.0, %v1900
        %v1965 = vsub.f32 0.0, %v1901
        %v1966 = vsub.f32 0.0, %v1902
        %v1967 = vsub.f32 0.0, %v1903
        %v1968 = vsub.f32 0.0, %v1904
        %v1969 = vsub.f32 0.0, %v1905
        %v1970 = vsub.f32 0.0, %v1906
        %v1971 = vsub.f32 0.0, %v1907
        %v1972 = vsub.f32 0.0, %v1908
        %v1973 = vsub.f32 0.0, %v1909
        %v1974 = vsub.f32 0.0, %v1910
        %v1975 = vsub.f32 0.0, %v1911
        %v1976 = vsel %vm1912, %v1944, %v1880
        %v1977 = vsel %vm1913, %v1945, %v1881
        %v1978 = vsel %vm1914, %v1946, %v1882
        %v1979 = vsel %vm1915, %v1947, %v1883
        %v1980 = vsel %vm1916, %v1948, %v1884
        %v1981 = vsel %vm1917, %v1949, %v1885
        %v1982 = vsel %vm1918, %v1950, %v1886
        %v1983 = vsel %vm1919, %v1951, %v1887
        %v1984 = vsel %vm1920, %v1952, %v1888
        %v1985 = vsel %vm1921, %v1953, %v1889
        %v1986 = vsel %vm1922, %v1954, %v1890
        %v1987 = vsel %vm1923, %v1955, %v1891
        %v1988 = vsel %vm1924, %v1956, %v1892
        %v1989 = vsel %vm1925, %v1957, %v1893
        %v1990 = vsel %vm1926, %v1958, %v1894
        %v1991 = vsel %vm1927, %v1959, %v1895
        %v1992 = vsel %vm1928, %v1960, %v1896
        %v1993 = vsel %vm1929, %v1961, %v1897
        %v1994 = vsel %vm1930, %v1962, %v1898
        %v1995 = vsel %vm1931, %v1963, %v1899
        %v1996 = vsel %vm1932, %v1964, %v1900
        %v1997 = vsel %vm1933, %v1965, %v1901
        %v1998 = vsel %vm1934, %v1966, %v1902
        %v1999 = vsel %vm1935, %v1967, %v1903
        %v2000 = vsel %vm1936, %v1968, %v1904
        %v2001 = vsel %vm1937, %v1969, %v1905
        %v2002 = vsel %vm1938, %v1970, %v1906
        %v2003 = vsel %vm1939, %v1971, %v1907
        %v2004 = vsel %vm1940, %v1972, %v1908
        %v2005 = vsel %vm1941, %v1973, %v1909
        %v2006 = vsel %vm1942, %v1974, %v1910
        %v2007 = vsel %vm1943, %v1975, %v1911
        %v2008 = vadd.f32 %v1976, 1.0
        %v2009 = vadd.f32 %v1977, 1.0
        %v2010 = vadd.f32 %v1978, 1.0
        %v2011 = vadd.f32 %v1979, 1.0
        %v2012 = vadd.f32 %v1980, 1.0
        %v2013 = vadd.f32 %v1981, 1.0
        %v2014 = vadd.f32 %v1982, 1.0
        %v2015 = vadd.f32 %v1983, 1.0
        %v2016 = vadd.f32 %v1984, 1.0
        %v2017 = vadd.f32 %v1985, 1.0
        %v2018 = vadd.f32 %v1986, 1.0
        %v2019 = vadd.f32 %v1987, 1.0
        %v2020 = vadd.f32 %v1988, 1.0
        %v2021 = vadd.f32 %v1989, 1.0
        %v2022 = vadd.f32 %v1990, 1.0
        %v2023 = vadd.f32 %v1991, 1.0
        %v2024 = vadd.f32 %v1992, 1.0
        %v2025 = vadd.f32 %v1993, 1.0
        %v2026 = vadd.f32 %v1994, 1.0
        %v2027 = vadd.f32 %v1995, 1.0
        %v2028 = vadd.f32 %v1996, 1.0
        %v2029 = vadd.f32 %v1997, 1.0
        %v2030 = vadd.f32 %v1998, 1.0
        %v2031 = vadd.f32 %v1999, 1.0
        %v2032 = vadd.f32 %v2000, 1.0
        %v2033 = vadd.f32 %v2001, 1.0
        %v2034 = vadd.f32 %v2002, 1.0
        %v2035 = vadd.f32 %v2003, 1.0
        %v2036 = vadd.f32 %v2004, 1.0
        %v2037 = vadd.f32 %v2005, 1.0
        %v2038 = vadd.f32 %v2006, 1.0
        %v2039 = vadd.f32 %v2007, 1.0
        %v2040 = vmul.f32 %v792, %v2008
        %v2041 = vmul.f32 %v793, %v2009
        %v2042 = vmul.f32 %v794, %v2010
        %v2043 = vmul.f32 %v795, %v2011
        %v2044 = vmul.f32 %v796, %v2012
        %v2045 = vmul.f32 %v797, %v2013
        %v2046 = vmul.f32 %v798, %v2014
        %v2047 = vmul.f32 %v799, %v2015
        %v2048 = vmul.f32 %v800, %v2016
        %v2049 = vmul.f32 %v801, %v2017
        %v2050 = vmul.f32 %v802, %v2018
        %v2051 = vmul.f32 %v803, %v2019
        %v2052 = vmul.f32 %v804, %v2020
        %v2053 = vmul.f32 %v805, %v2021
        %v2054 = vmul.f32 %v806, %v2022
        %v2055 = vmul.f32 %v807, %v2023
        %v2056 = vmul.f32 %v808, %v2024
        %v2057 = vmul.f32 %v809, %v2025
        %v2058 = vmul.f32 %v810, %v2026
        %v2059 = vmul.f32 %v811, %v2027
        %v2060 = vmul.f32 %v812, %v2028
        %v2061 = vmul.f32 %v813, %v2029
        %v2062 = vmul.f32 %v814, %v2030
        %v2063 = vmul.f32 %v815, %v2031
        %v2064 = vmul.f32 %v816, %v2032
        %v2065 = vmul.f32 %v817, %v2033
        %v2066 = vmul.f32 %v818, %v2034
        %v2067 = vmul.f32 %v819, %v2035
        %v2068 = vmul.f32 %v820, %v2036
        %v2069 = vmul.f32 %v821, %v2037
        %v2070 = vmul.f32 %v822, %v2038
        %v2071 = vmul.f32 %v823, %v2039
        %v2072 = vld [vmem:[#allocation8] sm:$0xff]
        %v2073 = vld [vmem:[#allocation8 + $0x8] sm:$0xff]
        %v2074 = vld [vmem:[#allocation8 + $0x10] sm:$0xff]
        %v2075 = vld [vmem:[#allocation8 + $0x18] sm:$0xff]
        %v2076 = vld [vmem:[#allocation8 + $0x20] sm:$0xff]
        %v2077 = vld [vmem:[#allocation8 + $0x28] sm:$0xff]
        %v2078 = vld [vmem:[#allocation8 + $0x30] sm:$0xff]
        %v2079 = vld [vmem:[#allocation8 + $0x38] sm:$0xff]
        %v2080 = vld [vmem:[#allocation8 + $0x40] sm:$0xff]
        %v2081 = vld [vmem:[#allocation8 + $0x48] sm:$0xff]
        %v2082 = vld [vmem:[#allocation8 + $0x50] sm:$0xff]
        %v2083 = vld [vmem:[#allocation8 + $0x58] sm:$0xff]
        %v2084 = vld [vmem:[#allocation8 + $0x60] sm:$0xff]
        %v2085 = vld [vmem:[#allocation8 + $0x68] sm:$0xff]
        %v2086 = vld [vmem:[#allocation8 + $0x70] sm:$0xff]
        %v2087 = vld [vmem:[#allocation8 + $0x78] sm:$0xff]
        %v2088 = vld [vmem:[#allocation8 + $0x80] sm:$0xff]
        %v2089 = vld [vmem:[#allocation8 + $0x88] sm:$0xff]
        %v2090 = vld [vmem:[#allocation8 + $0x90] sm:$0xff]
        %v2091 = vld [vmem:[#allocation8 + $0x98] sm:$0xff]
        %v2092 = vld [vmem:[#allocation8 + $0xa0] sm:$0xff]
        %v2093 = vld [vmem:[#allocation8 + $0xa8] sm:$0xff]
        %v2094 = vld [vmem:[#allocation8 + $0xb0] sm:$0xff]
        %v2095 = vld [vmem:[#allocation8 + $0xb8] sm:$0xff]
        %v2096 = vld [vmem:[#allocation8 + $0xc0] sm:$0xff]
        %v2097 = vld [vmem:[#allocation8 + $0xc8] sm:$0xff]
        %v2098 = vld [vmem:[#allocation8 + $0xd0] sm:$0xff]
        %v2099 = vld [vmem:[#allocation8 + $0xd8] sm:$0xff]
        %v2100 = vld [vmem:[#allocation8 + $0xe0] sm:$0xff]
        %v2101 = vld [vmem:[#allocation8 + $0xe8] sm:$0xff]
        %v2102 = vld [vmem:[#allocation8 + $0xf0] sm:$0xff]
        %v2103 = vld [vmem:[#allocation8 + $0xf8] sm:$0xff]
        %v2104 = vld [vmem:[#allocation8 + $0x100] sm:$0xff]
        %v2105 = vld [vmem:[#allocation8 + $0x108] sm:$0xff]
        %v2106 = vld [vmem:[#allocation8 + $0x110] sm:$0xff]
        %v2107 = vld [vmem:[#allocation8 + $0x118] sm:$0xff]
        %v2108 = vld [vmem:[#allocation8 + $0x120] sm:$0xff]
        %v2109 = vld [vmem:[#allocation8 + $0x128] sm:$0xff]
        %v2110 = vld [vmem:[#allocation8 + $0x130] sm:$0xff]
        %v2111 = vld [vmem:[#allocation8 + $0x138] sm:$0xff]
        %v2112 = vld [vmem:[#allocation8 + $0x140] sm:$0xff]
        %v2113 = vld [vmem:[#allocation8 + $0x148] sm:$0xff]
        %v2114 = vld [vmem:[#allocation8 + $0x150] sm:$0xff]
        %v2115 = vld [vmem:[#allocation8 + $0x158] sm:$0xff]
        %v2116 = vld [vmem:[#allocation8 + $0x160] sm:$0xff]
        %v2117 = vld [vmem:[#allocation8 + $0x168] sm:$0xff]
        %v2118 = vld [vmem:[#allocation8 + $0x170] sm:$0xff]
        %v2119 = vld [vmem:[#allocation8 + $0x178] sm:$0xff]
        %v2120 = vld [vmem:[#allocation8 + $0x180] sm:$0xff]
        %v2121 = vld [vmem:[#allocation8 + $0x188] sm:$0xff]
        %v2122 = vld [vmem:[#allocation8 + $0x190] sm:$0xff]
        %v2123 = vld [vmem:[#allocation8 + $0x198] sm:$0xff]
        %v2124 = vld [vmem:[#allocation8 + $0x1a0] sm:$0xff]
        %v2125 = vld [vmem:[#allocation8 + $0x1a8] sm:$0xff]
        %v2126 = vld [vmem:[#allocation8 + $0x1b0] sm:$0xff]
        %v2127 = vld [vmem:[#allocation8 + $0x1b8] sm:$0xff]
        %v2128 = vld [vmem:[#allocation8 + $0x1c0] sm:$0xff]
        %v2129 = vld [vmem:[#allocation8 + $0x1c8] sm:$0xff]
        %v2130 = vld [vmem:[#allocation8 + $0x1d0] sm:$0xff]
        %v2131 = vld [vmem:[#allocation8 + $0x1d8] sm:$0xff]
        %v2132 = vld [vmem:[#allocation8 + $0x1e0] sm:$0xff]
        %v2133 = vld [vmem:[#allocation8 + $0x1e8] sm:$0xff]
        %v2134 = vld [vmem:[#allocation8 + $0x1f0] sm:$0xff]
        %v2135 = vld [vmem:[#allocation8 + $0x1f8] sm:$0xff]
        %v2136 = vld [vmem:[#allocation8 + $0x200] sm:$0xff]
        %v2137 = vld [vmem:[#allocation8 + $0x208] sm:$0xff]
        %v2138 = vld [vmem:[#allocation8 + $0x210] sm:$0xff]
        %v2139 = vld [vmem:[#allocation8 + $0x218] sm:$0xff]
        %v2140 = vld [vmem:[#allocation8 + $0x220] sm:$0xff]
        %v2141 = vld [vmem:[#allocation8 + $0x228] sm:$0xff]
        %v2142 = vld [vmem:[#allocation8 + $0x230] sm:$0xff]
        %v2143 = vld [vmem:[#allocation8 + $0x238] sm:$0xff]
        %v2144 = vld [vmem:[#allocation8 + $0x240] sm:$0xff]
        %v2145 = vld [vmem:[#allocation8 + $0x248] sm:$0xff]
        %v2146 = vld [vmem:[#allocation8 + $0x250] sm:$0xff]
        %v2147 = vld [vmem:[#allocation8 + $0x258] sm:$0xff]
        %v2148 = vld [vmem:[#allocation8 + $0x260] sm:$0xff]
        %v2149 = vld [vmem:[#allocation8 + $0x268] sm:$0xff]
        %v2150 = vld [vmem:[#allocation8 + $0x270] sm:$0xff]
        %v2151 = vld [vmem:[#allocation8 + $0x278] sm:$0xff]
        %v2152 = vld [vmem:[#allocation8 + $0x280] sm:$0xff]
        %v2153 = vld [vmem:[#allocation8 + $0x288] sm:$0xff]
        %v2154 = vld [vmem:[#allocation8 + $0x290] sm:$0xff]
        %v2155 = vld [vmem:[#allocation8 + $0x298] sm:$0xff]
        %v2156 = vld [vmem:[#allocation8 + $0x2a0] sm:$0xff]
        %v2157 = vld [vmem:[#allocation8 + $0x2a8] sm:$0xff]
        %v2158 = vld [vmem:[#allocation8 + $0x2b0] sm:$0xff]
        %v2159 = vld [vmem:[#allocation8 + $0x2b8] sm:$0xff]
        %v2160 = vld [vmem:[#allocation8 + $0x2c0] sm:$0xff]
        %v2161 = vld [vmem:[#allocation8 + $0x2c8] sm:$0xff]
        %v2162 = vld [vmem:[#allocation8 + $0x2d0] sm:$0xff]
        %v2163 = vld [vmem:[#allocation8 + $0x2d8] sm:$0xff]
        %v2164 = vld [vmem:[#allocation8 + $0x2e0] sm:$0xff]
        %v2165 = vld [vmem:[#allocation8 + $0x2e8] sm:$0xff]
        %v2166 = vld [vmem:[#allocation8 + $0x2f0] sm:$0xff]
        %v2167 = vld [vmem:[#allocation8 + $0x2f8] sm:$0xff]
        %v2168 = vld [vmem:[#allocation8 + $0x300] sm:$0xff]
        %v2169 = vld [vmem:[#allocation8 + $0x308] sm:$0xff]
        %v2170 = vld [vmem:[#allocation8 + $0x310] sm:$0xff]
        %v2171 = vld [vmem:[#allocation8 + $0x318] sm:$0xff]
        %v2172 = vld [vmem:[#allocation8 + $0x320] sm:$0xff]
        %v2173 = vld [vmem:[#allocation8 + $0x328] sm:$0xff]
        %v2174 = vld [vmem:[#allocation8 + $0x330] sm:$0xff]
        %v2175 = vld [vmem:[#allocation8 + $0x338] sm:$0xff]
        %v2176 = vld [vmem:[#allocation8 + $0x340] sm:$0xff]
        %v2177 = vld [vmem:[#allocation8 + $0x348] sm:$0xff]
        %v2178 = vld [vmem:[#allocation8 + $0x350] sm:$0xff]
        %v2179 = vld [vmem:[#allocation8 + $0x358] sm:$0xff]
        %v2180 = vld [vmem:[#allocation8 + $0x360] sm:$0xff]
        %v2181 = vld [vmem:[#allocation8 + $0x368] sm:$0xff]
        %v2182 = vld [vmem:[#allocation8 + $0x370] sm:$0xff]
        %v2183 = vld [vmem:[#allocation8 + $0x378] sm:$0xff]
        %v2184 = vld [vmem:[#allocation8 + $0x380] sm:$0xff]
        %v2185 = vld [vmem:[#allocation8 + $0x388] sm:$0xff]
        %v2186 = vld [vmem:[#allocation8 + $0x390] sm:$0xff]
        %v2187 = vld [vmem:[#allocation8 + $0x398] sm:$0xff]
        %v2188 = vld [vmem:[#allocation8 + $0x3a0] sm:$0xff]
        %v2189 = vld [vmem:[#allocation8 + $0x3a8] sm:$0xff]
        %v2190 = vld [vmem:[#allocation8 + $0x3b0] sm:$0xff]
        %v2191 = vld [vmem:[#allocation8 + $0x3b8] sm:$0xff]
        %v2192 = vld [vmem:[#allocation8 + $0x3c0] sm:$0xff]
        %v2193 = vld [vmem:[#allocation8 + $0x3c8] sm:$0xff]
        %v2194 = vld [vmem:[#allocation8 + $0x3d0] sm:$0xff]
        %v2195 = vld [vmem:[#allocation8 + $0x3d8] sm:$0xff]
        %v2196 = vld [vmem:[#allocation8 + $0x3e0] sm:$0xff]
        %v2197 = vld [vmem:[#allocation8 + $0x3e8] sm:$0xff]
        %v2198 = vld [vmem:[#allocation8 + $0x3f0] sm:$0xff]
        %v2199 = vld [vmem:[#allocation8 + $0x3f8] sm:$0xff]
        %v2200 = vld [vmem:[#allocation10] sm:$0x3]
        %v2202 = vperm.slane %v2200, 0
        %v2203 = vperm.slane %v2200, 1
        %2206 = vmatpush.msra.mxu0 %v2102
        %2207 = vmatpush.msra.mxu0 %v2100
        %2208 = vmatpush.msra.mxu0 %v2098
        %2209 = vmatpush.msra.mxu0 %v2096
        %2210 = vmatpush.msra.mxu0 %v2094
        %2211 = vmatpush.msra.mxu0 %v2092
        %2212 = vmatpush.msra.mxu0 %v2090
        %2213 = vmatpush.msra.mxu0 %v2088
        %2214 = vmatpush.msra.mxu0 %v2086
        %2215 = vmatpush.msra.mxu0 %v2084
        %2216 = vmatpush.msra.mxu0 %v2082
        %2217 = vmatpush.msra.mxu0 %v2080
        %2218 = vmatpush.msra.mxu0 %v2078
        %2219 = vmatpush.msra.mxu0 %v2076
        %2220 = vmatpush.msra.mxu0 %v2074
        %2221 = vmatpush.msra.mxu0 %v2072
        %2222 = vmatmul.f32.gmra.mxu0 %v2040
        %v2223 = vpop.f32.mrf.mxu0
        %v2224 = vadd.f32 %v2202, %v2223
        %2225 = vmatmul.f32.gmra.mxu0 %v2044
        %v2226 = vpop.f32.mrf.mxu0
        %v2227 = vadd.f32 %v2202, %v2226
        %2228 = vmatmul.f32.gmra.mxu0 %v2048
        %v2229 = vpop.f32.mrf.mxu0
        %v2230 = vadd.f32 %v2202, %v2229
        %2231 = vmatmul.f32.gmra.mxu0 %v2052
        %v2232 = vpop.f32.mrf.mxu0
        %v2233 = vadd.f32 %v2202, %v2232
        %2234 = vmatmul.f32.gmra.mxu0 %v2056
        %v2235 = vpop.f32.mrf.mxu0
        %v2236 = vadd.f32 %v2202, %v2235
        %2237 = vmatmul.f32.gmra.mxu0 %v2060
        %v2238 = vpop.f32.mrf.mxu0
        %v2239 = vadd.f32 %v2202, %v2238
        %2240 = vmatmul.f32.gmra.mxu0 %v2064
        %v2241 = vpop.f32.mrf.mxu0
        %v2242 = vadd.f32 %v2202, %v2241
        %2243 = vmatmul.f32.gmra.mxu0 %v2068
        %v2244 = vpop.f32.mrf.mxu0
        %v2245 = vadd.f32 %v2202, %v2244
        %2246 = vdwg.mxu0
        %2247 = vmatpush.msra.mxu0 %v2134
        %2248 = vmatpush.msra.mxu0 %v2132
        %2249 = vmatpush.msra.mxu0 %v2130
        %2250 = vmatpush.msra.mxu0 %v2128
        %2251 = vmatpush.msra.mxu0 %v2126
        %2252 = vmatpush.msra.mxu0 %v2124
        %2253 = vmatpush.msra.mxu0 %v2122
        %2254 = vmatpush.msra.mxu0 %v2120
        %2255 = vmatpush.msra.mxu0 %v2118
        %2256 = vmatpush.msra.mxu0 %v2116
        %2257 = vmatpush.msra.mxu0 %v2114
        %2258 = vmatpush.msra.mxu0 %v2112
        %2259 = vmatpush.msra.mxu0 %v2110
        %2260 = vmatpush.msra.mxu0 %v2108
        %2261 = vmatpush.msra.mxu0 %v2106
        %2262 = vmatpush.msra.mxu0 %v2104
        %2263 = vmatmul.f32.gmra.mxu0 %v2041
        %v2264 = vpop.f32.mrf.mxu0
        %v2265 = vadd.f32 %v2224, %v2264
        %2266 = vmatmul.f32.gmra.mxu0 %v2045
        %v2267 = vpop.f32.mrf.mxu0
        %v2268 = vadd.f32 %v2227, %v2267
        %2269 = vmatmul.f32.gmra.mxu0 %v2049
        %v2270 = vpop.f32.mrf.mxu0
        %v2271 = vadd.f32 %v2230, %v2270
        %2272 = vmatmul.f32.gmra.mxu0 %v2053
        %v2273 = vpop.f32.mrf.mxu0
        %v2274 = vadd.f32 %v2233, %v2273
        %2275 = vmatmul.f32.gmra.mxu0 %v2057
        %v2276 = vpop.f32.mrf.mxu0
        %v2277 = vadd.f32 %v2236, %v2276
        %2278 = vmatmul.f32.gmra.mxu0 %v2061
        %v2279 = vpop.f32.mrf.mxu0
        %v2280 = vadd.f32 %v2239, %v2279
        %2281 = vmatmul.f32.gmra.mxu0 %v2065
        %v2282 = vpop.f32.mrf.mxu0
        %v2283 = vadd.f32 %v2242, %v2282
        %2284 = vmatmul.f32.gmra.mxu0 %v2069
        %v2285 = vpop.f32.mrf.mxu0
        %v2286 = vadd.f32 %v2245, %v2285
        %2287 = vdwg.mxu0
        %2288 = vmatpush.msra.mxu0 %v2166
        %2289 = vmatpush.msra.mxu0 %v2164
        %2290 = vmatpush.msra.mxu0 %v2162
        %2291 = vmatpush.msra.mxu0 %v2160
        %2292 = vmatpush.msra.mxu0 %v2158
        %2293 = vmatpush.msra.mxu0 %v2156
        %2294 = vmatpush.msra.mxu0 %v2154
        %2295 = vmatpush.msra.mxu0 %v2152
        %2296 = vmatpush.msra.mxu0 %v2150
        %2297 = vmatpush.msra.mxu0 %v2148
        %2298 = vmatpush.msra.mxu0 %v2146
        %2299 = vmatpush.msra.mxu0 %v2144
        %2300 = vmatpush.msra.mxu0 %v2142
        %2301 = vmatpush.msra.mxu0 %v2140
        %2302 = vmatpush.msra.mxu0 %v2138
        %2303 = vmatpush.msra.mxu0 %v2136
        %2304 = vmatmul.f32.gmra.mxu0 %v2042
        %v2305 = vpop.f32.mrf.mxu0
        %v2306 = vadd.f32 %v2265, %v2305
        %2307 = vmatmul.f32.gmra.mxu0 %v2046
        %v2308 = vpop.f32.mrf.mxu0
        %v2309 = vadd.f32 %v2268, %v2308
        %2310 = vmatmul.f32.gmra.mxu0 %v2050
        %v2311 = vpop.f32.mrf.mxu0
        %v2312 = vadd.f32 %v2271, %v2311
        %2313 = vmatmul.f32.gmra.mxu0 %v2054
        %v2314 = vpop.f32.mrf.mxu0
        %v2315 = vadd.f32 %v2274, %v2314
        %2316 = vmatmul.f32.gmra.mxu0 %v2058
        %v2317 = vpop.f32.mrf.mxu0
        %v2318 = vadd.f32 %v2277, %v2317
        %2319 = vmatmul.f32.gmra.mxu0 %v2062
        %v2320 = vpop.f32.mrf.mxu0
        %v2321 = vadd.f32 %v2280, %v2320
        %2322 = vmatmul.f32.gmra.mxu0 %v2066
        %v2323 = vpop.f32.mrf.mxu0
        %v2324 = vadd.f32 %v2283, %v2323
        %2325 = vmatmul.f32.gmra.mxu0 %v2070
        %v2326 = vpop.f32.mrf.mxu0
        %v2327 = vadd.f32 %v2286, %v2326
        %2328 = vdwg.mxu0
        %2329 = vmatpush.msra.mxu0 %v2198
        %2330 = vmatpush.msra.mxu0 %v2196
        %2331 = vmatpush.msra.mxu0 %v2194
        %2332 = vmatpush.msra.mxu0 %v2192
        %2333 = vmatpush.msra.mxu0 %v2190
        %2334 = vmatpush.msra.mxu0 %v2188
        %2335 = vmatpush.msra.mxu0 %v2186
        %2336 = vmatpush.msra.mxu0 %v2184
        %2337 = vmatpush.msra.mxu0 %v2182
        %2338 = vmatpush.msra.mxu0 %v2180
        %2339 = vmatpush.msra.mxu0 %v2178
        %2340 = vmatpush.msra.mxu0 %v2176
        %2341 = vmatpush.msra.mxu0 %v2174
        %2342 = vmatpush.msra.mxu0 %v2172
        %2343 = vmatpush.msra.mxu0 %v2170
        %2344 = vmatpush.msra.mxu0 %v2168
        %2345 = vmatmul.f32.gmra.mxu0 %v2043
        %v2346 = vpop.f32.mrf.mxu0
        %v2347 = vadd.f32 %v2306, %v2346
        %2348 = vmatmul.f32.gmra.mxu0 %v2047
        %v2349 = vpop.f32.mrf.mxu0
        %v2350 = vadd.f32 %v2309, %v2349
        %2351 = vmatmul.f32.gmra.mxu0 %v2051
        %v2352 = vpop.f32.mrf.mxu0
        %v2353 = vadd.f32 %v2312, %v2352
        %2354 = vmatmul.f32.gmra.mxu0 %v2055
        %v2355 = vpop.f32.mrf.mxu0
        %v2356 = vadd.f32 %v2315, %v2355
        %2357 = vmatmul.f32.gmra.mxu0 %v2059
        %v2358 = vpop.f32.mrf.mxu0
        %v2359 = vadd.f32 %v2318, %v2358
        %2360 = vmatmul.f32.gmra.mxu0 %v2063
        %v2361 = vpop.f32.mrf.mxu0
        %v2362 = vadd.f32 %v2321, %v2361
        %2363 = vmatmul.f32.gmra.mxu0 %v2067
        %v2364 = vpop.f32.mrf.mxu0
        %v2365 = vadd.f32 %v2324, %v2364
        %2366 = vmatmul.f32.gmra.mxu0 %v2071
        %v2367 = vpop.f32.mrf.mxu0
        %v2368 = vadd.f32 %v2327, %v2367
        %2369 = vdwg.mxu0
        %2370 = vmatpush.msra.mxu0 %v2103
        %2371 = vmatpush.msra.mxu0 %v2101
        %2372 = vmatpush.msra.mxu0 %v2099
        %2373 = vmatpush.msra.mxu0 %v2097
        %2374 = vmatpush.msra.mxu0 %v2095
        %2375 = vmatpush.msra.mxu0 %v2093
        %2376 = vmatpush.msra.mxu0 %v2091
        %2377 = vmatpush.msra.mxu0 %v2089
        %2378 = vmatpush.msra.mxu0 %v2087
        %2379 = vmatpush.msra.mxu0 %v2085
        %2380 = vmatpush.msra.mxu0 %v2083
        %2381 = vmatpush.msra.mxu0 %v2081
        %2382 = vmatpush.msra.mxu0 %v2079
        %2383 = vmatpush.msra.mxu0 %v2077
        %2384 = vmatpush.msra.mxu0 %v2075
        %2385 = vmatpush.msra.mxu0 %v2073
        %2386 = vmatmul.f32.gmra.mxu0 %v2040
        %v2387 = vpop.f32.mrf.mxu0
        %v2388 = vadd.f32 %v2203, %v2387
        %2389 = vmatmul.f32.gmra.mxu0 %v2044
        %v2390 = vpop.f32.mrf.mxu0
        %v2391 = vadd.f32 %v2203, %v2390
        %2392 = vmatmul.f32.gmra.mxu0 %v2048
        %v2393 = vpop.f32.mrf.mxu0
        %v2394 = vadd.f32 %v2203, %v2393
        %2395 = vmatmul.f32.gmra.mxu0 %v2052
        %v2396 = vpop.f32.mrf.mxu0
        %v2397 = vadd.f32 %v2203, %v2396
        %2398 = vmatmul.f32.gmra.mxu0 %v2056
        %v2399 = vpop.f32.mrf.mxu0
        %v2400 = vadd.f32 %v2203, %v2399
        %2401 = vmatmul.f32.gmra.mxu0 %v2060
        %v2402 = vpop.f32.mrf.mxu0
        %v2403 = vadd.f32 %v2203, %v2402
        %2404 = vmatmul.f32.gmra.mxu0 %v2064
        %v2405 = vpop.f32.mrf.mxu0
        %v2406 = vadd.f32 %v2203, %v2405
        %2407 = vmatmul.f32.gmra.mxu0 %v2068
        %v2408 = vpop.f32.mrf.mxu0
        %v2409 = vadd.f32 %v2203, %v2408
        %2410 = vdwg.mxu0
        %2411 = vmatpush.msra.mxu0 %v2135
        %2412 = vmatpush.msra.mxu0 %v2133
        %2413 = vmatpush.msra.mxu0 %v2131
        %2414 = vmatpush.msra.mxu0 %v2129
        %2415 = vmatpush.msra.mxu0 %v2127
        %2416 = vmatpush.msra.mxu0 %v2125
        %2417 = vmatpush.msra.mxu0 %v2123
        %2418 = vmatpush.msra.mxu0 %v2121
        %2419 = vmatpush.msra.mxu0 %v2119
        %2420 = vmatpush.msra.mxu0 %v2117
        %2421 = vmatpush.msra.mxu0 %v2115
        %2422 = vmatpush.msra.mxu0 %v2113
        %2423 = vmatpush.msra.mxu0 %v2111
        %2424 = vmatpush.msra.mxu0 %v2109
        %2425 = vmatpush.msra.mxu0 %v2107
        %2426 = vmatpush.msra.mxu0 %v2105
        %2427 = vmatmul.f32.gmra.mxu0 %v2041
        %v2428 = vpop.f32.mrf.mxu0
        %v2429 = vadd.f32 %v2388, %v2428
        %2430 = vmatmul.f32.gmra.mxu0 %v2045
        %v2431 = vpop.f32.mrf.mxu0
        %v2432 = vadd.f32 %v2391, %v2431
        %2433 = vmatmul.f32.gmra.mxu0 %v2049
        %v2434 = vpop.f32.mrf.mxu0
        %v2435 = vadd.f32 %v2394, %v2434
        %2436 = vmatmul.f32.gmra.mxu0 %v2053
        %v2437 = vpop.f32.mrf.mxu0
        %v2438 = vadd.f32 %v2397, %v2437
        %2439 = vmatmul.f32.gmra.mxu0 %v2057
        %v2440 = vpop.f32.mrf.mxu0
        %v2441 = vadd.f32 %v2400, %v2440
        %2442 = vmatmul.f32.gmra.mxu0 %v2061
        %v2443 = vpop.f32.mrf.mxu0
        %v2444 = vadd.f32 %v2403, %v2443
        %2445 = vmatmul.f32.gmra.mxu0 %v2065
        %v2446 = vpop.f32.mrf.mxu0
        %v2447 = vadd.f32 %v2406, %v2446
        %2448 = vmatmul.f32.gmra.mxu0 %v2069
        %v2449 = vpop.f32.mrf.mxu0
        %v2450 = vadd.f32 %v2409, %v2449
        %2451 = vdwg.mxu0
        %2452 = vmatpush.msra.mxu0 %v2167
        %2453 = vmatpush.msra.mxu0 %v2165
        %2454 = vmatpush.msra.mxu0 %v2163
        %2455 = vmatpush.msra.mxu0 %v2161
        %2456 = vmatpush.msra.mxu0 %v2159
        %2457 = vmatpush.msra.mxu0 %v2157
        %2458 = vmatpush.msra.mxu0 %v2155
        %2459 = vmatpush.msra.mxu0 %v2153
        %2460 = vmatpush.msra.mxu0 %v2151
        %2461 = vmatpush.msra.mxu0 %v2149
        %2462 = vmatpush.msra.mxu0 %v2147
        %2463 = vmatpush.msra.mxu0 %v2145
        %2464 = vmatpush.msra.mxu0 %v2143
        %2465 = vmatpush.msra.mxu0 %v2141
        %2466 = vmatpush.msra.mxu0 %v2139
        %2467 = vmatpush.msra.mxu0 %v2137
        %2468 = vmatmul.f32.gmra.mxu0 %v2042
        %v2469 = vpop.f32.mrf.mxu0
        %v2470 = vadd.f32 %v2429, %v2469
        %2471 = vmatmul.f32.gmra.mxu0 %v2046
        %v2472 = vpop.f32.mrf.mxu0
        %v2473 = vadd.f32 %v2432, %v2472
        %2474 = vmatmul.f32.gmra.mxu0 %v2050
        %v2475 = vpop.f32.mrf.mxu0
        %v2476 = vadd.f32 %v2435, %v2475
        %2477 = vmatmul.f32.gmra.mxu0 %v2054
        %v2478 = vpop.f32.mrf.mxu0
        %v2479 = vadd.f32 %v2438, %v2478
        %2480 = vmatmul.f32.gmra.mxu0 %v2058
        %v2481 = vpop.f32.mrf.mxu0
        %v2482 = vadd.f32 %v2441, %v2481
        %2483 = vmatmul.f32.gmra.mxu0 %v2062
        %v2484 = vpop.f32.mrf.mxu0
        %v2485 = vadd.f32 %v2444, %v2484
        %2486 = vmatmul.f32.gmra.mxu0 %v2066
        %v2487 = vpop.f32.mrf.mxu0
        %v2488 = vadd.f32 %v2447, %v2487
        %2489 = vmatmul.f32.gmra.mxu0 %v2070
        %v2490 = vpop.f32.mrf.mxu0
        %v2491 = vadd.f32 %v2450, %v2490
        %2492 = vdwg.mxu0
        %2493 = vmatpush.msra.mxu0 %v2199
        %2494 = vmatpush.msra.mxu0 %v2197
        %2495 = vmatpush.msra.mxu0 %v2195
        %2496 = vmatpush.msra.mxu0 %v2193
        %2497 = vmatpush.msra.mxu0 %v2191
        %2498 = vmatpush.msra.mxu0 %v2189
        %2499 = vmatpush.msra.mxu0 %v2187
        %2500 = vmatpush.msra.mxu0 %v2185
        %2501 = vmatpush.msra.mxu0 %v2183
        %2502 = vmatpush.msra.mxu0 %v2181
        %2503 = vmatpush.msra.mxu0 %v2179
        %2504 = vmatpush.msra.mxu0 %v2177
        %2505 = vmatpush.msra.mxu0 %v2175
        %2506 = vmatpush.msra.mxu0 %v2173
        %2507 = vmatpush.msra.mxu0 %v2171
        %2508 = vmatpush.msra.mxu0 %v2169
        %2509 = vmatmul.f32.gmra.mxu0 %v2043
        %v2510 = vpop.f32.mrf.mxu0
        %v2511 = vadd.f32 %v2470, %v2510
        %2512 = vmatmul.f32.gmra.mxu0 %v2047
        %v2513 = vpop.f32.mrf.mxu0
        %v2514 = vadd.f32 %v2473, %v2513
        %2515 = vmatmul.f32.gmra.mxu0 %v2051
        %v2516 = vpop.f32.mrf.mxu0
        %v2517 = vadd.f32 %v2476, %v2516
        %2518 = vmatmul.f32.gmra.mxu0 %v2055
        %v2519 = vpop.f32.mrf.mxu0
        %v2520 = vadd.f32 %v2479, %v2519
        %2521 = vmatmul.f32.gmra.mxu0 %v2059
        %v2522 = vpop.f32.mrf.mxu0
        %v2523 = vadd.f32 %v2482, %v2522
        %2524 = vmatmul.f32.gmra.mxu0 %v2063
        %v2525 = vpop.f32.mrf.mxu0
        %v2526 = vadd.f32 %v2485, %v2525
        %2527 = vmatmul.f32.gmra.mxu0 %v2067
        %v2528 = vpop.f32.mrf.mxu0
        %v2529 = vadd.f32 %v2488, %v2528
        %2530 = vmatmul.f32.gmra.mxu0 %v2071
        %v2531 = vpop.f32.mrf.mxu0
        %v2532 = vadd.f32 %v2491, %v2531
        %2533 = vdwg.mxu0
        %2534 = vst [vmem:[%s307] sm:$0xff] %v2347
        %2535 = vst [vmem:[%s307 + $0x8] sm:$0xff] %v2511
        %2536 = vst [vmem:[%s307 + $0x10] sm:$0xff] %v2350
        %2537 = vst [vmem:[%s307 + $0x18] sm:$0xff] %v2514
        %2538 = vst [vmem:[%s307 + $0x20] sm:$0xff] %v2353
        %2539 = vst [vmem:[%s307 + $0x28] sm:$0xff] %v2517
        %2540 = vst [vmem:[%s307 + $0x30] sm:$0xff] %v2356
        %2541 = vst [vmem:[%s307 + $0x38] sm:$0xff] %v2520
        %2542 = vst [vmem:[%s307 + $0x40] sm:$0xff] %v2359
        %2543 = vst [vmem:[%s307 + $0x48] sm:$0xff] %v2523
        %2544 = vst [vmem:[%s307 + $0x50] sm:$0xff] %v2362
        %2545 = vst [vmem:[%s307 + $0x58] sm:$0xff] %v2526
        %2546 = vst [vmem:[%s307 + $0x60] sm:$0xff] %v2365
        %2547 = vst [vmem:[%s307 + $0x68] sm:$0xff] %v2529
        %2548 = vst [vmem:[%s307 + $0x70] sm:$0xff] %v2368
        %2549 = vst [vmem:[%s307 + $0x78] sm:$0xff] %v2532
        %s2550 = sand.u32 %s142, 1
        %s2551 = scalar_lea.sflag [#allocation4], %s2550
        %s2552 = sand.u32 %s142, 1
        %s2553 = smul.addr %s2552, 128
        %s2554 = scalar_lea.vmem [#allocation11], %s2553
        // Predicated region
        $region61: #{mlp_block.1} parent=39 // pred_check
          %p2555 = pneg %p152
        $region62: #{mlp_block.1} parent=39 // pred_check_branch
          %2557 = sbr.rel (%p2555) target = $region64
        $region63: #{mlp_block.1} parent=39 // pred_region
          %s2558 = smul.u32 8, %s24
          %2560 = vsyncadd %s2551, 0
          %s2561 = smul.addr %s2558, 2
          %s2562 = smul.addr %s2561, 8
          %s2563 = scalar_lea.hbm %s5, %s2562
          %s2564 = sshll.u32 %s2554, 4
          %s2565 = int_to_ptr.vmem [resolvable:$true] %s2564
          %s2566 = sshll.u32 %s2563, 4
          %s2567 = int_to_ptr.hbm [resolvable:$true] %s2566
          %2572 = dma.vmem_to_hbm [thread:$0]  %s2565, 2048, %s2567, %s2551, 256, 256, 16
        $region64: #{mlp_block.1} parent=39 // pred_fallthru
          _
      $region40: #{mlp_block.1} parent=5 // pred_fallthru
        _
      %p2573 = scmp.le.s32.totalorder 2, %s19
      // Predicated region
      $region65: #{mlp_block.1} parent=5 // pred_check
        %p2574 = pneg %p2573
      $region66: #{mlp_block.1} parent=5 // pred_check_branch
        %2576 = sbr.rel (%p2574) target = $region68
      $region67: #{mlp_block.1} parent=5 // pred_region
        %s2577 = ssub.s32 %s19, 2
        // Predicated region
        $region69: #{mlp_block.1} parent=67 // pred_check
          %p2578 = pneg %p158
        $region70: #{mlp_block.1} parent=67 // pred_check_branch
          %2580 = sbr.rel (%p2578) target = $region72
        $region71: #{mlp_block.1} parent=67 // pred_region
          %s2581 = sand.u32 %s143, 1
          %s2582 = scalar_lea.sflag [#allocation4], %s2581
          %s2583 = sand.u32 %s143, 1
          %s2584 = smul.addr %s2583, 128
          %s2585 = scalar_lea.vmem [#allocation11], %s2584
          %2587 = dma.done %s2582, 2048
        $region72: #{mlp_block.1} parent=67 // pred_fallthru
          _
      $region68: #{mlp_block.1} parent=5 // pred_fallthru
        _
    $region6: #{mlp_block.1} parent=1 // loop_footer
      %s23 = sadd.s32 1, %s19
    $region7: #{mlp_block.1} parent=1 // loop_footer_branch
      %18 = sbr.rel target = $region3
    $region8: #{mlp_block.1} parent=1 // loop_exit
      _
    %2588 = vsyncpa [#allocation3], 1
    %s2589 = scalar_lea.sflag [#allocation3], 1
    %2590 = vsyncpa %s2589, 1
    %2591 = vsyncpa [#allocation6], 1
    %2592 = vsyncpa [#allocation9], 1
    %2593 = vsyncpa [#allocation4], 1
    %s2594 = scalar_lea.sflag [#allocation4], 1
    %2595 = vsyncpa %s2594, 1

</llo_original>
